<compile_context>
chip_gen: v7x
topology: tpu7x:2x2x1
jax: 0.10.0
libtpu: 0.0.40
codegen_flags: <defaults>
</compile_context>

<pallas_src>
import functools
import math

import jax
import jax.numpy as jnp
from jax import lax
from jax.experimental import pallas as pl
from jax.experimental.pallas import tpu as pltpu


# ----------------------------------------------------------------------------- fused kernel

def _decoder_kernel(tgt_ref, mem_ref,
                    mask1_ref, kvmask1_ref, ones1_ref,
                    mask2_ref, kvmask2_ref, ones2_ref,
                    wqkv1_ref, bqkv1_ref, wo1_ref, bo1_ref, lng_ref, lnb_ref,
                    wq2_ref, bq2_ref, wkv2_ref, bkv2_ref, wo2_ref, bo2_ref,
                    o_ref, *, n_roles, role_dim, scale1, scale2, eps):
    """Whole decoder forward for one batch element; everything stays in vregs/VMEM."""
    f32 = jnp.float32

    # ------------------------- stage 1: self-MHA over the target sequence -----------------
    x = tgt_ref[0].astype(f32)                       # (L, state_dim)
    att1 = wo1_ref.shape[0]                          # N * role_dim

    # one packed projection matmul instead of 3*H tiny dots
    qkv = jnp.dot(x, wqkv1_ref[...], preferred_element_type=f32) + bqkv1_ref[...]
    q1 = qkv[:, :att1]                               # (L, H*Dh)
    k1 = qkv[:, att1:2 * att1]
    v1 = qkv[:, 2 * att1:]

    # block-diagonal batching over heads: tile K/V along sublanes, zero off-head dims
    h1 = kvmask1_ref.shape[0] // k1.shape[0]         # = N heads
    kvm1 = kvmask1_ref[...]
    k_bd = jnp.concatenate([k1] * h1, axis=0) * kvm1     # (H*L, H*Dh)
    v_bd = jnp.concatenate([v1] * h1, axis=0) * kvm1

    # one score matmul for all heads: S[l, h*L+l'] = Q_h[l] . K_h[l']
    s = lax.dot_general(q1, k_bd, (((1,), (1,)), ((), ())),
                        preferred_element_type=f32) * scale1 + mask1_ref[...]
    # global row-max is valid for per-head softmax (same constant within each head segment)
    s = s - jnp.max(s, axis=-1, keepdims=True)
    p = jnp.exp(s)                                   # masked (-inf) columns -> exactly 0
    denom = jnp.dot(p, ones1_ref[...], preferred_element_type=f32)   # per-head sums, broadcast
    p = p / denom                                    # exact divide (no approx reciprocal)
    o1 = jnp.dot(p, v_bd, preferred_element_type=f32)                # (L, H*Dh) concat-heads
    y1 = jnp.dot(o1, wo1_ref[...], preferred_element_type=f32) + bo1_ref[...]

    # LayerNorm epilogue (still in vregs)
    mu = jnp.mean(y1, axis=-1, keepdims=True)
    yc = y1 - mu
    var = jnp.mean(yc * yc, axis=-1, keepdims=True)
    q_att = yc * lax.rsqrt(var + eps) * lng_ref[...] + lnb_ref[...]  # (L, N*Rd)

    # ------------------------- stage 2: cross-MHA against memory --------------------------
    # role-major query stacking: row r = n*L + l (fixed by a free wrapper transpose later)
    q_flat = jnp.concatenate(
        [q_att[:, n * role_dim:(n + 1) * role_dim] for n in range(n_roles)],
        axis=0)                                                       # (N*L, Rd)
    q2 = jnp.dot(q_flat, wq2_ref[...], preferred_element_type=f32) + bq2_ref[...]  # (N*L, H2*Dh2)

    mem = mem_ref[0].astype(f32)                                      # (L*mem_len, Rd)
    kv2 = jnp.dot(mem, wkv2_ref[...], preferred_element_type=f32) + bkv2_ref[...]
    att2 = wo2_ref.shape[0]                                           # role_att_dim
    k2 = kv2[:, :att2]
    v2 = kv2[:, att2:]

    h2 = kvmask2_ref.shape[0] // k2.shape[0]                          # role_heads
    kvm2 = kvmask2_ref[...]
    k2_bd = jnp.concatenate([k2] * h2, axis=0) * kvm2                 # (H2*L*M, H2*Dh2)
    v2_bd = jnp.concatenate([v2] * h2, axis=0) * kvm2

    # one score matmul for all (head, position, role) combinations; position block-diagonal
    # structure is enforced by the precomputed additive mask.
    s2 = lax.dot_general(q2, k2_bd, (((1,), (1,)), ((), ())),
                         preferred_element_type=f32) * scale2 + mask2_ref[...]     # (N*L, H2*L*M)
    s2 = s2 - jnp.max(s2, axis=-1, keepdims=True)
    p2 = jnp.exp(s2)
    denom2 = jnp.dot(p2, ones2_ref[...], preferred_element_type=f32)
    p2 = p2 / denom2
    o2 = jnp.dot(p2, v2_bd, preferred_element_type=f32)               # (N*L, H2*Dh2)
    y2 = jnp.dot(o2, wo2_ref[...], preferred_element_type=f32) + bo2_ref[...]      # (N*L, att_out)

    # single slab store per grid step (one DMA writeback)
    o_ref[0] = y2.astype(o_ref.dtype)


# ----------------------------------------------------------------------------- pallas wrapper

def _const_spec(arr):
    zeros = (0,) * arr.ndim
    return pl.BlockSpec(arr.shape, lambda b: zeros)


def decoder_constants(tgt_mask, tgt_len, n_roles, role_dim, mem_len, n_heads2, head_dim2):
    """Host-side constant masks enabling block-diagonal (batched-head) attention."""
    L, M, H1, Dh1 = tgt_len, mem_len, n_roles, role_dim
    # ---- attn1 ----
    mask1 = jnp.tile(tgt_mask.astype(jnp.float32), (1, H1))                       # (L, H1*L)
    key_head1 = (jnp.arange(H1 * L) // L)[:, None]
    kvmask1 = (key_head1 == (jnp.arange(H1 * Dh1) // Dh1)[None, :]).astype(jnp.float32)
    ones1 = (key_head1 == (jnp.arange(H1 * L) // L)[None, :]).astype(jnp.float32)  # kron(I,1)
    # ---- attn2 ----  query row r = n*L + l attends only the keys of its own position l
    q_pos = (jnp.arange(n_roles * L) % L)[:, None]
    k_pos = ((jnp.arange(n_heads2 * L * M) % (L * M)) // M)[None, :]
    mask2 = jnp.where(q_pos == k_pos, 0.0, -jnp.inf).astype(jnp.float32)           # (N*L, H2*L*M)
    key_head2 = (jnp.arange(n_heads2 * L * M) // (L * M))[:, None]
    kvmask2 = (key_head2 ==
               (jnp.arange(n_heads2 * head_dim2) // head_dim2)[None, :]).astype(jnp.float32)
    ones2 = (key_head2 ==
             (jnp.arange(n_heads2 * L * M) // (L * M))[None, :]).astype(jnp.float32)
    return mask1, kvmask1, ones1, mask2, kvmask2, ones2


def transformer_decoder_forward(params, tgt, memory, cfg, tgt_mask=None):
    B, L, Din = tgt.shape
    N = cfg["N"]
    Rd = cfg["role_embedding_dim"]
    H2 = cfg["role_heads"]
    att_dim2 = cfg["role_att_dim"]
    att_out = cfg["att_out_dim"]
    mem_len = memory.shape[1]
    Dh2 = att_dim2 // H2
    if tgt_mask is None:
        tgt_mask = make_subsequent_mask(L, cfg["canSee"])

    mask1, kvmask1, ones1, mask2, kvmask2, ones2 = decoder_constants(
        tgt_mask, L, N, Rd, mem_len, H2, Dh2)

    # memory batches align with q_att's reshape: leading dim is (batch-major, position-minor)
    mem3 = memory.reshape(B, L * mem_len, Rd)

    scale1 = 1.0 / (cfg["soft_temperature"] * math.sqrt(Rd))    # head_dim of attn1 == Rd
    scale2 = 1.0 / (cfg["soft_temperature"] * math.sqrt(Dh2))

    kern = functools.partial(_decoder_kernel, n_roles=N, role_dim=Rd,
                             scale1=scale1, scale2=scale2, eps=1e-5)
    p = params
    inputs = (tgt, mem3, mask1, kvmask1, ones1, mask2, kvmask2, ones2,
              p["wqkv1"], p["bqkv1"], p["wo1"], p["bo1"], p["ln_g"], p["ln_b"],
              p["wq2"], p["bq2"], p["wkv2"], p["bkv2"], p["wo2"], p["bo2"])
    in_specs = [pl.BlockSpec((1, L, Din), lambda b: (b, 0, 0)),
                pl.BlockSpec((1, L * mem_len, Rd), lambda b: (b, 0, 0))]
    in_specs += [_const_spec(a) for a in inputs[2:]]

    out = pl.pallas_call(
        kern,
        out_shape=jax.ShapeDtypeStruct((B, N * L, att_out), tgt.dtype),
        grid=(B,),
        in_specs=in_specs,
        out_specs=pl.BlockSpec((1, N * L, att_out), lambda b: (b, 0, 0)),
        compiler_params=pltpu.CompilerParams(dimension_semantics=("parallel",)),
    )(*inputs)

    # kernel rows are role-major (n, l); free wrapper-side layout plumbing back to (B*L, N, out)
    return out.reshape(B, N, L, att_out).transpose(0, 2, 1, 3).reshape(B * L, N, att_out)


# ----------------------------------------------------------------------------- params / glue

def init_linear(key, out_dim, in_dim, scale=0.1):
    kw, kb = jax.random.split(key)
    w = scale * jax.random.normal(kw, (out_dim, in_dim), jnp.float32)   # torch layout (out, in)
    b = scale * jax.random.normal(kb, (out_dim,), jnp.float32)
    return w, b


def make_subsequent_mask(tgt_len, can_see):
    # Matches the reference loop exactly:
    #   0 where max(0, i-canSee-1) <= j <= i (band + diagonal), -inf elsewhere.
    i = jnp.arange(tgt_len)[:, None]
    j = jnp.arange(tgt_len)[None, :]
    visible = (j <= i) & (j >= i - can_see - 1)
    return jnp.where(visible, 0.0, -jnp.inf).astype(jnp.float32)


def make_positional_encoding(max_seq_len, d_model):
    # Constructed for parity with the module's __init__; unused in forward (same as reference).
    position = jnp.arange(max_seq_len, dtype=jnp.float32)[:, None]
    div_term = jnp.exp(jnp.arange(0, d_model, 2, dtype=jnp.float32) * (-math.log(10000.0) / d_model))
    pe = jnp.zeros((max_seq_len, d_model), jnp.float32)
    pe = pe.at[:, 0::2].set(jnp.sin(position * div_term))
    pe = pe.at[:, 1::2].set(jnp.cos(position * div_term))
    return pe


def init_decoder_params(key, cfg):
    """Init in torch layout, then re-lay ONCE into packed input-major kernel layouts."""
    N, Rd = cfg["N"], cfg["role_embedding_dim"]
    att1 = N * Rd
    att2, att_out, sd = cfg["role_att_dim"], cfg["att_out_dim"], cfg["state_dim"]
    k = jax.random.split(key, 8)
    wq1, bq1 = init_linear(k[0], att1, sd)
    wk1, bk1 = init_linear(k[1], att1, sd)
    wv1, bv1 = init_linear(k[2], att1, sd)
    wo1, bo1 = init_linear(k[3], att1, att1)
    wq2, bq2 = init_linear(k[4], att2, Rd)
    wk2, bk2 = init_linear(k[5], att2, Rd)
    wv2, bv2 = init_linear(k[6], att2, Rd)
    wo2, bo2 = init_linear(k[7], att_out, att2)
    return dict(
        # attn1: packed input-major QKV (state_dim, 3*att1) -> one projection matmul in-kernel
        wqkv1=jnp.concatenate([wq1.T, wk1.T, wv1.T], axis=1),
        bqkv1=jnp.concatenate([bq1, bk1, bv1]).reshape(1, 3 * att1),
        wo1=wo1.T, bo1=bo1.reshape(1, att1),
        ln_g=jnp.ones((1, att1), jnp.float32),
        ln_b=jnp.zeros((1, att1), jnp.float32),
        # attn2: Q separate (applied to q_att roles), K/V packed (applied to memory)
        wq2=wq2.T, bq2=bq2.reshape(1, att2),
        wkv2=jnp.concatenate([wk2.T, wv2.T], axis=1),
        bkv2=jnp.concatenate([bk2, bv2]).reshape(1, 2 * att2),
        wo2=wo2.T, bo2=bo2.reshape(1, att_out),
        # built for __init__ parity; unused in forward (same as the reference module)
        pos_enc=make_positional_encoding(cfg["episode_limit"] + 1, cfg["state_dim"]),
    )


# ----------------------------------------------------------------------------- main

if __name__ == "__main__":
    cfg = dict(
        episode_limit=7,          # -> max_seq_len = 8
        canSee=10,
        N=4,
        role_embedding_dim=8,     # N * role_embedding_dim = 32
        state_dim=32,
        soft_temperature=1.0,
        role_heads=2,
        role_att_dim=16,
        att_out_dim=8,
    )
    batch, tgt_len, mem_len = 2, 8, 6

    key = jax.random.PRNGKey(0)
    k_param, k_tgt, k_mem = jax.random.split(key, 3)
    params = init_decoder_params(k_param, cfg)

    tgt = jax.random.normal(k_tgt, (batch, tgt_len, cfg["state_dim"]), jnp.float32)
    # memory aligns with q_att.reshape(-1, N, Rd): (batch * tgt_len, mem_len, role_embedding_dim)
    memory = jax.random.normal(k_mem, (batch * tgt_len, mem_len, cfg["role_embedding_dim"]),
                               jnp.float32)

    fwd = jax.jit(functools.partial(transformer_decoder_forward, cfg=cfg))
    out = fwd(params, tgt, memory)
    jax.block_until_ready(out)

    assert out.shape == (batch * tgt_len, cfg["N"], cfg["att_out_dim"])
    assert bool(jnp.all(jnp.isfinite(out)))
    print("KERNEL_OK")
</pallas_src>

<mosaic_0001>
module attributes {stable_mosaic.version = 11 : i64} {
  func.func @_decoder_kernel(%arg0: i32, %arg1: memref<1x8x32xf32, #tpu.memory_space<vmem>>, %arg2: memref<1x48x8xf32, #tpu.memory_space<vmem>>, %arg3: memref<8x32xf32, #tpu.memory_space<vmem>>, %arg4: memref<32x32xf32, #tpu.memory_space<vmem>>, %arg5: memref<32x32xf32, #tpu.memory_space<vmem>>, %arg6: memref<32x96xf32, #tpu.memory_space<vmem>>, %arg7: memref<96x16xf32, #tpu.memory_space<vmem>>, %arg8: memref<96x96xf32, #tpu.memory_space<vmem>>, %arg9: memref<32x96xf32, #tpu.memory_space<vmem>>, %arg10: memref<1x96xf32, #tpu.memory_space<vmem>>, %arg11: memref<32x32xf32, #tpu.memory_space<vmem>>, %arg12: memref<1x32xf32, #tpu.memory_space<vmem>>, %arg13: memref<1x32xf32, #tpu.memory_space<vmem>>, %arg14: memref<1x32xf32, #tpu.memory_space<vmem>>, %arg15: memref<8x16xf32, #tpu.memory_space<vmem>>, %arg16: memref<1x16xf32, #tpu.memory_space<vmem>>, %arg17: memref<8x32xf32, #tpu.memory_space<vmem>>, %arg18: memref<1x32xf32, #tpu.memory_space<vmem>>, %arg19: memref<16x8xf32, #tpu.memory_space<vmem>>, %arg20: memref<1x8xf32, #tpu.memory_space<vmem>>, %arg21: memref<1x32x8xf32, #tpu.memory_space<vmem>>) attributes {dimension_semantics = [#tpu.dimension_semantics<parallel>], iteration_bounds = array<i64: 2>, scalar_prefetch = 0 : i64, scratch_operands = 0 : i64, tpu.core_type = #tpu.core_type<tc>, window_params = [{transform_indices = @transform_0, window_bounds = array<i64: 1, 8, 32>}, {transform_indices = @transform_1, window_bounds = array<i64: 1, 48, 8>}, {pipeline_mode = #tpu.pipeline_mode<synchronous>, transform_indices = @transform_2, window_bounds = array<i64: 8, 32>}, {pipeline_mode = #tpu.pipeline_mode<synchronous>, transform_indices = @transform_3, window_bounds = array<i64: 32, 32>}, {pipeline_mode = #tpu.pipeline_mode<synchronous>, transform_indices = @transform_4, window_bounds = array<i64: 32, 32>}, {pipeline_mode = #tpu.pipeline_mode<synchronous>, transform_indices = @transform_5, window_bounds = array<i64: 32, 96>}, {pipeline_mode = #tpu.pipeline_mode<synchronous>, transform_indices = @transform_6, window_bounds = array<i64: 96, 16>}, {pipeline_mode = #tpu.pipeline_mode<synchronous>, transform_indices = @transform_7, window_bounds = array<i64: 96, 96>}, {pipeline_mode = #tpu.pipeline_mode<synchronous>, transform_indices = @transform_8, window_bounds = array<i64: 32, 96>}, {pipeline_mode = #tpu.pipeline_mode<synchronous>, transform_indices = @transform_9, window_bounds = array<i64: 1, 96>}, {pipeline_mode = #tpu.pipeline_mode<synchronous>, transform_indices = @transform_10, window_bounds = array<i64: 32, 32>}, {pipeline_mode = #tpu.pipeline_mode<synchronous>, transform_indices = @transform_11, window_bounds = array<i64: 1, 32>}, {pipeline_mode = #tpu.pipeline_mode<synchronous>, transform_indices = @transform_12, window_bounds = array<i64: 1, 32>}, {pipeline_mode = #tpu.pipeline_mode<synchronous>, transform_indices = @transform_13, window_bounds = array<i64: 1, 32>}, {pipeline_mode = #tpu.pipeline_mode<synchronous>, transform_indices = @transform_14, window_bounds = array<i64: 8, 16>}, {pipeline_mode = #tpu.pipeline_mode<synchronous>, transform_indices = @transform_15, window_bounds = array<i64: 1, 16>}, {pipeline_mode = #tpu.pipeline_mode<synchronous>, transform_indices = @transform_16, window_bounds = array<i64: 8, 32>}, {pipeline_mode = #tpu.pipeline_mode<synchronous>, transform_indices = @transform_17, window_bounds = array<i64: 1, 32>}, {pipeline_mode = #tpu.pipeline_mode<synchronous>, transform_indices = @transform_18, window_bounds = array<i64: 16, 8>}, {pipeline_mode = #tpu.pipeline_mode<synchronous>, transform_indices = @transform_19, window_bounds = array<i64: 1, 8>}, {transform_indices = @transform_20, window_bounds = array<i64: 1, 32, 8>}]} {
    %c0 = arith.constant 0 : index
    %c0_0 = arith.constant 0 : index
    %c0_1 = arith.constant 0 : index
    %0 = vector.load %arg1[%c0, %c0_0, %c0_1] : memref<1x8x32xf32, #tpu.memory_space<vmem>>, vector<1x8x32xf32>
    %1 = vector.shape_cast %0 : vector<1x8x32xf32> to vector<8x32xf32>
    %c0_2 = arith.constant 0 : index
    %c0_3 = arith.constant 0 : index
    %2 = vector.load %arg9[%c0_2, %c0_3] : memref<32x96xf32, #tpu.memory_space<vmem>>, vector<32x96xf32>
    %cst = arith.constant dense<0.000000e+00> : vector<8x96xf32>
    %3 = tpu.matmul %1, %2, %cst {dimension_numbers = #tpu.dot_dimension_numbers<[1], [0], [0], [1], [0, 0, 1, 1], [], []>} : vector<8x32xf32>, vector<32x96xf32>, vector<8x96xf32> -> vector<8x96xf32>
    %c0_4 = arith.constant 0 : index
    %c0_5 = arith.constant 0 : index
    %4 = vector.load %arg10[%c0_4, %c0_5] : memref<1x96xf32, #tpu.memory_space<vmem>>, vector<1x96xf32>
    %5 = vector.broadcast %4 : vector<1x96xf32> to vector<8x96xf32>
    %6 = arith.addf %3, %5 : vector<8x96xf32>
    %7 = vector.extract_strided_slice %6 {offsets = [0, 0], sizes = [8, 32], strides = [1, 1]} : vector<8x96xf32> to vector<8x32xf32>
    %8 = vector.extract_strided_slice %6 {offsets = [0, 32], sizes = [8, 32], strides = [1, 1]} : vector<8x96xf32> to vector<8x32xf32>
    %9 = vector.extract_strided_slice %6 {offsets = [0, 64], sizes = [8, 32], strides = [1, 1]} : vector<8x96xf32> to vector<8x32xf32>
    %c0_6 = arith.constant 0 : index
    %c0_7 = arith.constant 0 : index
    %10 = vector.load %arg4[%c0_6, %c0_7] : memref<32x32xf32, #tpu.memory_space<vmem>>, vector<32x32xf32>
    %11 = tpu.concatenate %8, %8, %8, %8 in 0 : vector<8x32xf32>, vector<8x32xf32>, vector<8x32xf32>, vector<8x32xf32> -> vector<32x32xf32>
    %12 = arith.mulf %11, %10 : vector<32x32xf32>
    %13 = tpu.concatenate %9, %9, %9, %9 in 0 : vector<8x32xf32>, vector<8x32xf32>, vector<8x32xf32>, vector<8x32xf32> -> vector<32x32xf32>
    %14 = arith.mulf %13, %10 : vector<32x32xf32>
    %cst_8 = arith.constant dense<0.000000e+00> : vector<8x32xf32>
    %15 = tpu.matmul %7, %12, %cst_8 {dimension_numbers = #tpu.dot_dimension_numbers<[1], [1], [0], [0], [0, 0, 1, 0], [], []>} : vector<8x32xf32>, vector<32x32xf32>, vector<8x32xf32> -> vector<8x32xf32>
    %cst_9 = arith.constant 0.353553385 : f32
    %16 = vector.broadcast %cst_9 : f32 to vector<8x32xf32>
    %17 = arith.mulf %15, %16 : vector<8x32xf32>
    %c0_10 = arith.constant 0 : index
    %c0_11 = arith.constant 0 : index
    %18 = vector.load %arg3[%c0_10, %c0_11] : memref<8x32xf32, #tpu.memory_space<vmem>>, vector<8x32xf32>
    %19 = arith.addf %17, %18 : vector<8x32xf32>
    %cst_12 = arith.constant dense<0xFF800000> : vector<8xf32>
    %20 = vector.multi_reduction <maximumf>, %19, %cst_12 [1] : vector<8x32xf32> to vector<8xf32>
    %21 = vector.shape_cast %20 : vector<8xf32> to vector<8x1xf32>
    %22 = vector.broadcast %21 : vector<8x1xf32> to vector<8x32xf32>
    %23 = arith.subf %19, %22 : vector<8x32xf32>
    %24 = math.exp %23 : vector<8x32xf32>
    %c0_13 = arith.constant 0 : index
    %c0_14 = arith.constant 0 : index
    %25 = vector.load %arg5[%c0_13, %c0_14] : memref<32x32xf32, #tpu.memory_space<vmem>>, vector<32x32xf32>
    %cst_15 = arith.constant dense<0.000000e+00> : vector<8x32xf32>
    %26 = tpu.matmul %24, %25, %cst_15 {dimension_numbers = #tpu.dot_dimension_numbers<[1], [0], [0], [1], [0, 0, 1, 1], [], []>} : vector<8x32xf32>, vector<32x32xf32>, vector<8x32xf32> -> vector<8x32xf32>
    %27 = arith.divf %24, %26 : vector<8x32xf32>
    %cst_16 = arith.constant dense<0.000000e+00> : vector<8x32xf32>
    %28 = tpu.matmul %27, %14, %cst_16 {dimension_numbers = #tpu.dot_dimension_numbers<[1], [0], [0], [1], [0, 0, 1, 1], [], []>} : vector<8x32xf32>, vector<32x32xf32>, vector<8x32xf32> -> vector<8x32xf32>
    %c0_17 = arith.constant 0 : index
    %c0_18 = arith.constant 0 : index
    %29 = vector.load %arg11[%c0_17, %c0_18] : memref<32x32xf32, #tpu.memory_space<vmem>>, vector<32x32xf32>
    %cst_19 = arith.constant dense<0.000000e+00> : vector<8x32xf32>
    %30 = tpu.matmul %28, %29, %cst_19 {dimension_numbers = #tpu.dot_dimension_numbers<[1], [0], [0], [1], [0, 0, 1, 1], [], []>} : vector<8x32xf32>, vector<32x32xf32>, vector<8x32xf32> -> vector<8x32xf32>
    %c0_20 = arith.constant 0 : index
    %c0_21 = arith.constant 0 : index
    %31 = vector.load %arg12[%c0_20, %c0_21] : memref<1x32xf32, #tpu.memory_space<vmem>>, vector<1x32xf32>
    %32 = vector.broadcast %31 : vector<1x32xf32> to vector<8x32xf32>
    %33 = arith.addf %30, %32 : vector<8x32xf32>
    %cst_22 = arith.constant dense<0.000000e+00> : vector<8xf32>
    %34 = vector.multi_reduction <add>, %33, %cst_22 [1] : vector<8x32xf32> to vector<8xf32>
    %35 = vector.shape_cast %34 : vector<8xf32> to vector<8x1xf32>
    %cst_23 = arith.constant 3.200000e+01 : f32
    %36 = vector.broadcast %cst_23 : f32 to vector<8x1xf32>
    %37 = arith.divf %35, %36 : vector<8x1xf32>
    %38 = vector.broadcast %37 : vector<8x1xf32> to vector<8x32xf32>
    %39 = arith.subf %33, %38 : vector<8x32xf32>
    %40 = arith.mulf %39, %39 : vector<8x32xf32>
    %cst_24 = arith.constant dense<0.000000e+00> : vector<8xf32>
    %41 = vector.multi_reduction <add>, %40, %cst_24 [1] : vector<8x32xf32> to vector<8xf32>
    %42 = vector.shape_cast %41 : vector<8xf32> to vector<8x1xf32>
    %cst_25 = arith.constant 3.200000e+01 : f32
    %43 = vector.broadcast %cst_25 : f32 to vector<8x1xf32>
    %44 = arith.divf %42, %43 : vector<8x1xf32>
    %cst_26 = arith.constant 9.99999974E-6 : f32
    %45 = vector.broadcast %cst_26 : f32 to vector<8x1xf32>
    %46 = arith.addf %44, %45 : vector<8x1xf32>
    %47 = math.rsqrt %46 : vector<8x1xf32>
    %48 = vector.broadcast %47 : vector<8x1xf32> to vector<8x32xf32>
    %49 = arith.mulf %39, %48 : vector<8x32xf32>
    %c0_27 = arith.constant 0 : index
    %c0_28 = arith.constant 0 : index
    %50 = vector.load %arg13[%c0_27, %c0_28] : memref<1x32xf32, #tpu.memory_space<vmem>>, vector<1x32xf32>
    %51 = vector.broadcast %50 : vector<1x32xf32> to vector<8x32xf32>
    %52 = arith.mulf %49, %51 : vector<8x32xf32>
    %c0_29 = arith.constant 0 : index
    %c0_30 = arith.constant 0 : index
    %53 = vector.load %arg14[%c0_29, %c0_30] : memref<1x32xf32, #tpu.memory_space<vmem>>, vector<1x32xf32>
    %54 = vector.broadcast %53 : vector<1x32xf32> to vector<8x32xf32>
    %55 = arith.addf %52, %54 : vector<8x32xf32>
    %56 = vector.extract_strided_slice %55 {offsets = [0, 0], sizes = [8, 8], strides = [1, 1]} : vector<8x32xf32> to vector<8x8xf32>
    %57 = vector.extract_strided_slice %55 {offsets = [0, 8], sizes = [8, 8], strides = [1, 1]} : vector<8x32xf32> to vector<8x8xf32>
    %58 = vector.extract_strided_slice %55 {offsets = [0, 16], sizes = [8, 8], strides = [1, 1]} : vector<8x32xf32> to vector<8x8xf32>
    %59 = vector.extract_strided_slice %55 {offsets = [0, 24], sizes = [8, 8], strides = [1, 1]} : vector<8x32xf32> to vector<8x8xf32>
    %60 = tpu.concatenate %56, %57, %58, %59 in 0 : vector<8x8xf32>, vector<8x8xf32>, vector<8x8xf32>, vector<8x8xf32> -> vector<32x8xf32>
    %c0_31 = arith.constant 0 : index
    %c0_32 = arith.constant 0 : index
    %61 = vector.load %arg15[%c0_31, %c0_32] : memref<8x16xf32, #tpu.memory_space<vmem>>, vector<8x16xf32>
    %cst_33 = arith.constant dense<0.000000e+00> : vector<32x16xf32>
    %62 = tpu.matmul %60, %61, %cst_33 {dimension_numbers = #tpu.dot_dimension_numbers<[1], [0], [0], [1], [0, 0, 1, 1], [], []>} : vector<32x8xf32>, vector<8x16xf32>, vector<32x16xf32> -> vector<32x16xf32>
    %c0_34 = arith.constant 0 : index
    %c0_35 = arith.constant 0 : index
    %63 = vector.load %arg16[%c0_34, %c0_35] : memref<1x16xf32, #tpu.memory_space<vmem>>, vector<1x16xf32>
    %64 = vector.broadcast %63 : vector<1x16xf32> to vector<32x16xf32>
    %65 = arith.addf %62, %64 : vector<32x16xf32>
    %c0_36 = arith.constant 0 : index
    %c0_37 = arith.constant 0 : index
    %c0_38 = arith.constant 0 : index
    %66 = vector.load %arg2[%c0_36, %c0_37, %c0_38] : memref<1x48x8xf32, #tpu.memory_space<vmem>>, vector<1x48x8xf32>
    %67 = vector.shape_cast %66 : vector<1x48x8xf32> to vector<48x8xf32>
    %c0_39 = arith.constant 0 : index
    %c0_40 = arith.constant 0 : index
    %68 = vector.load %arg17[%c0_39, %c0_40] : memref<8x32xf32, #tpu.memory_space<vmem>>, vector<8x32xf32>
    %cst_41 = arith.constant dense<0.000000e+00> : vector<48x32xf32>
    %69 = tpu.matmul %67, %68, %cst_41 {dimension_numbers = #tpu.dot_dimension_numbers<[1], [0], [0], [1], [0, 0, 1, 1], [], []>} : vector<48x8xf32>, vector<8x32xf32>, vector<48x32xf32> -> vector<48x32xf32>
    %c0_42 = arith.constant 0 : index
    %c0_43 = arith.constant 0 : index
    %70 = vector.load %arg18[%c0_42, %c0_43] : memref<1x32xf32, #tpu.memory_space<vmem>>, vector<1x32xf32>
    %71 = vector.broadcast %70 : vector<1x32xf32> to vector<48x32xf32>
    %72 = arith.addf %69, %71 : vector<48x32xf32>
    %73 = vector.extract_strided_slice %72 {offsets = [0, 0], sizes = [48, 16], strides = [1, 1]} : vector<48x32xf32> to vector<48x16xf32>
    %74 = vector.extract_strided_slice %72 {offsets = [0, 16], sizes = [48, 16], strides = [1, 1]} : vector<48x32xf32> to vector<48x16xf32>
    %c0_44 = arith.constant 0 : index
    %c0_45 = arith.constant 0 : index
    %75 = vector.load %arg7[%c0_44, %c0_45] : memref<96x16xf32, #tpu.memory_space<vmem>>, vector<96x16xf32>
    %76 = tpu.concatenate %73, %73 in 0 : vector<48x16xf32>, vector<48x16xf32> -> vector<96x16xf32>
    %77 = arith.mulf %76, %75 : vector<96x16xf32>
    %78 = tpu.concatenate %74, %74 in 0 : vector<48x16xf32>, vector<48x16xf32> -> vector<96x16xf32>
    %79 = arith.mulf %78, %75 : vector<96x16xf32>
    %cst_46 = arith.constant dense<0.000000e+00> : vector<32x96xf32>
    %80 = tpu.matmul %65, %77, %cst_46 {dimension_numbers = #tpu.dot_dimension_numbers<[1], [1], [0], [0], [0, 0, 1, 0], [], []>} : vector<32x16xf32>, vector<96x16xf32>, vector<32x96xf32> -> vector<32x96xf32>
    %cst_47 = arith.constant 0.353553385 : f32
    %81 = vector.broadcast %cst_47 : f32 to vector<32x96xf32>
    %82 = arith.mulf %80, %81 : vector<32x96xf32>
    %c0_48 = arith.constant 0 : index
    %c0_49 = arith.constant 0 : index
    %83 = vector.load %arg6[%c0_48, %c0_49] : memref<32x96xf32, #tpu.memory_space<vmem>>, vector<32x96xf32>
    %84 = arith.addf %82, %83 : vector<32x96xf32>
    %cst_50 = arith.constant dense<0xFF800000> : vector<32xf32>
    %85 = vector.multi_reduction <maximumf>, %84, %cst_50 [1] : vector<32x96xf32> to vector<32xf32>
    %86 = vector.shape_cast %85 : vector<32xf32> to vector<32x1xf32>
    %87 = vector.broadcast %86 : vector<32x1xf32> to vector<32x96xf32>
    %88 = arith.subf %84, %87 : vector<32x96xf32>
    %89 = math.exp %88 : vector<32x96xf32>
    %c0_51 = arith.constant 0 : index
    %c0_52 = arith.constant 0 : index
    %90 = vector.load %arg8[%c0_51, %c0_52] : memref<96x96xf32, #tpu.memory_space<vmem>>, vector<96x96xf32>
    %cst_53 = arith.constant dense<0.000000e+00> : vector<32x96xf32>
    %91 = tpu.matmul %89, %90, %cst_53 {dimension_numbers = #tpu.dot_dimension_numbers<[1], [0], [0], [1], [0, 0, 1, 1], [], []>} : vector<32x96xf32>, vector<96x96xf32>, vector<32x96xf32> -> vector<32x96xf32>
    %92 = arith.divf %89, %91 : vector<32x96xf32>
    %cst_54 = arith.constant dense<0.000000e+00> : vector<32x16xf32>
    %93 = tpu.matmul %92, %79, %cst_54 {dimension_numbers = #tpu.dot_dimension_numbers<[1], [0], [0], [1], [0, 0, 1, 1], [], []>} : vector<32x96xf32>, vector<96x16xf32>, vector<32x16xf32> -> vector<32x16xf32>
    %c0_55 = arith.constant 0 : index
    %c0_56 = arith.constant 0 : index
    %94 = vector.load %arg19[%c0_55, %c0_56] : memref<16x8xf32, #tpu.memory_space<vmem>>, vector<16x8xf32>
    %cst_57 = arith.constant dense<0.000000e+00> : vector<32x8xf32>
    %95 = tpu.matmul %93, %94, %cst_57 {dimension_numbers = #tpu.dot_dimension_numbers<[1], [0], [0], [1], [0, 0, 1, 1], [], []>} : vector<32x16xf32>, vector<16x8xf32>, vector<32x8xf32> -> vector<32x8xf32>
    %c0_58 = arith.constant 0 : index
    %c0_59 = arith.constant 0 : index
    %96 = vector.load %arg20[%c0_58, %c0_59] : memref<1x8xf32, #tpu.memory_space<vmem>>, vector<1x8xf32>
    %97 = vector.broadcast %96 : vector<1x8xf32> to vector<32x8xf32>
    %98 = arith.addf %95, %97 : vector<32x8xf32>
    %c0_60 = arith.constant 0 : index
    %c0_61 = arith.constant 0 : index
    %c0_62 = arith.constant 0 : index
    %99 = vector.load %arg21[%c0_60, %c0_61, %c0_62] : memref<1x32x8xf32, #tpu.memory_space<vmem>>, vector<1x32x8xf32>
    %100 = vector.shape_cast %99 : vector<1x32x8xf32> to vector<32x8xf32>
    %101 = vector.shape_cast %98 : vector<32x8xf32> to vector<1x32x8xf32>
    tpu.vector_store %arg21[%c0_60, %c0_61, %c0_62], %101 {strides = array<i32>} : memref<1x32x8xf32, #tpu.memory_space<vmem>>, vector<1x32x8xf32>,
    return
  }
  func.func @transform_0(%arg0: i32) -> (i32, i32, i32) {
    %c0_i32 = arith.constant 0 : i32
    %c0_i32_0 = arith.constant 0 : i32
    %c0_i32_1 = arith.constant 0 : i32
    return %arg0, %c0_i32, %c0_i32_0 : i32, i32, i32
  }
  func.func @transform_1(%arg0: i32) -> (i32, i32, i32) {
    %c0_i32 = arith.constant 0 : i32
    %c0_i32_0 = arith.constant 0 : i32
    %c0_i32_1 = arith.constant 0 : i32
    return %arg0, %c0_i32, %c0_i32_0 : i32, i32, i32
  }
  func.func @transform_2(%arg0: i32) -> (i32, i32) {
    %c0_i32 = arith.constant 0 : i32
    %c0_i32_0 = arith.constant 0 : i32
    %c0_i32_1 = arith.constant 0 : i32
    return %c0_i32, %c0_i32_0 : i32, i32
  }
  func.func @transform_3(%arg0: i32) -> (i32, i32) {
    %c0_i32 = arith.constant 0 : i32
    %c0_i32_0 = arith.constant 0 : i32
    %c0_i32_1 = arith.constant 0 : i32
    return %c0_i32, %c0_i32_0 : i32, i32
  }
  func.func @transform_4(%arg0: i32) -> (i32, i32) {
    %c0_i32 = arith.constant 0 : i32
    %c0_i32_0 = arith.constant 0 : i32
    %c0_i32_1 = arith.constant 0 : i32
    return %c0_i32, %c0_i32_0 : i32, i32
  }
  func.func @transform_5(%arg0: i32) -> (i32, i32) {
    %c0_i32 = arith.constant 0 : i32
    %c0_i32_0 = arith.constant 0 : i32
    %c0_i32_1 = arith.constant 0 : i32
    return %c0_i32, %c0_i32_0 : i32, i32
  }
  func.func @transform_6(%arg0: i32) -> (i32, i32) {
    %c0_i32 = arith.constant 0 : i32
    %c0_i32_0 = arith.constant 0 : i32
    %c0_i32_1 = arith.constant 0 : i32
    return %c0_i32, %c0_i32_0 : i32, i32
  }
  func.func @transform_7(%arg0: i32) -> (i32, i32) {
    %c0_i32 = arith.constant 0 : i32
    %c0_i32_0 = arith.constant 0 : i32
    %c0_i32_1 = arith.constant 0 : i32
    return %c0_i32, %c0_i32_0 : i32, i32
  }
  func.func @transform_8(%arg0: i32) -> (i32, i32) {
    %c0_i32 = arith.constant 0 : i32
    %c0_i32_0 = arith.constant 0 : i32
    %c0_i32_1 = arith.constant 0 : i32
    return %c0_i32, %c0_i32_0 : i32, i32
  }
  func.func @transform_9(%arg0: i32) -> (i32, i32) {
    %c0_i32 = arith.constant 0 : i32
    %c0_i32_0 = arith.constant 0 : i32
    %c0_i32_1 = arith.constant 0 : i32
    return %c0_i32, %c0_i32_0 : i32, i32
  }
  func.func @transform_10(%arg0: i32) -> (i32, i32) {
    %c0_i32 = arith.constant 0 : i32
    %c0_i32_0 = arith.constant 0 : i32
    %c0_i32_1 = arith.constant 0 : i32
    return %c0_i32, %c0_i32_0 : i32, i32
  }
  func.func @transform_11(%arg0: i32) -> (i32, i32) {
    %c0_i32 = arith.constant 0 : i32
    %c0_i32_0 = arith.constant 0 : i32
    %c0_i32_1 = arith.constant 0 : i32
    return %c0_i32, %c0_i32_0 : i32, i32
  }
  func.func @transform_12(%arg0: i32) -> (i32, i32) {
    %c0_i32 = arith.constant 0 : i32
    %c0_i32_0 = arith.constant 0 : i32
    %c0_i32_1 = arith.constant 0 : i32
    return %c0_i32, %c0_i32_0 : i32, i32
  }
  func.func @transform_13(%arg0: i32) -> (i32, i32) {
    %c0_i32 = arith.constant 0 : i32
    %c0_i32_0 = arith.constant 0 : i32
    %c0_i32_1 = arith.constant 0 : i32
    return %c0_i32, %c0_i32_0 : i32, i32
  }
  func.func @transform_14(%arg0: i32) -> (i32, i32) {
    %c0_i32 = arith.constant 0 : i32
    %c0_i32_0 = arith.constant 0 : i32
    %c0_i32_1 = arith.constant 0 : i32
    return %c0_i32, %c0_i32_0 : i32, i32
  }
  func.func @transform_15(%arg0: i32) -> (i32, i32) {
    %c0_i32 = arith.constant 0 : i32
    %c0_i32_0 = arith.constant 0 : i32
    %c0_i32_1 = arith.constant 0 : i32
    return %c0_i32, %c0_i32_0 : i32, i32
  }
  func.func @transform_16(%arg0: i32) -> (i32, i32) {
    %c0_i32 = arith.constant 0 : i32
    %c0_i32_0 = arith.constant 0 : i32
    %c0_i32_1 = arith.constant 0 : i32
    return %c0_i32, %c0_i32_0 : i32, i32
  }
  func.func @transform_17(%arg0: i32) -> (i32, i32) {
    %c0_i32 = arith.constant 0 : i32
    %c0_i32_0 = arith.constant 0 : i32
    %c0_i32_1 = arith.constant 0 : i32
    return %c0_i32, %c0_i32_0 : i32, i32
  }
  func.func @transform_18(%arg0: i32) -> (i32, i32) {
    %c0_i32 = arith.constant 0 : i32
    %c0_i32_0 = arith.constant 0 : i32
    %c0_i32_1 = arith.constant 0 : i32
    return %c0_i32, %c0_i32_0 : i32, i32
  }
  func.func @transform_19(%arg0: i32) -> (i32, i32) {
    %c0_i32 = arith.constant 0 : i32
    %c0_i32_0 = arith.constant 0 : i32
    %c0_i32_1 = arith.constant 0 : i32
    return %c0_i32, %c0_i32_0 : i32, i32
  }
  func.func @transform_20(%arg0: i32) -> (i32, i32, i32) {
    %c0_i32 = arith.constant 0 : i32
    %c0_i32_0 = arith.constant 0 : i32
    %c0_i32_1 = arith.constant 0 : i32
    return %arg0, %c0_i32, %c0_i32_0 : i32, i32, i32
  }
}

</mosaic_0001>

<llo_original>
// kernel: tile.9
$region0: #{tile.9}
  %s0 = inlined_call_operand.vmem [shape: f32[8,4,8], index: 0, kind: input, shape index: {}]
  %s1 = inlined_call_operand.vmem [shape: f32[8,32], index: 1, kind: output, shape index: {}]
  $region1: #{tile.9} parent=0
    #allocation0 [shape = 'u8[32768]{0}', space=vmem, size = 0x8000, scoped, tag = 'scoped mem for input reshape']
    %s3 = sshllo.u32 0, 4
    %s4 = smul.addr 4, 7
    %s5 = scalar_lea.vmem %s0, %s4
    %v6 = vld [vmem:[%s5] sm:%s3]
    %s7 = scalar_lea.vmem [#allocation0], 56
    %8 = vst [vmem:[%s7] sm:%s3] %v6
    %s9 = smul.addr 4, 6
    %s10 = scalar_lea.vmem %s0, %s9
    %v11 = vld [vmem:[%s10] sm:%s3]
    %s12 = scalar_lea.vmem [#allocation0], 48
    %13 = vst [vmem:[%s12] sm:%s3] %v11
    %s14 = smul.addr 4, 5
    %s15 = scalar_lea.vmem %s0, %s14
    %v16 = vld [vmem:[%s15] sm:%s3]
    %s17 = scalar_lea.vmem [#allocation0], 40
    %18 = vst [vmem:[%s17] sm:%s3] %v16
    %s19 = smul.addr 4, 4
    %s20 = scalar_lea.vmem %s0, %s19
    %v21 = vld [vmem:[%s20] sm:%s3]
    %s22 = scalar_lea.vmem [#allocation0], 32
    %23 = vst [vmem:[%s22] sm:%s3] %v21
    %s24 = smul.addr 4, 3
    %s25 = scalar_lea.vmem %s0, %s24
    %v26 = vld [vmem:[%s25] sm:%s3]
    %s27 = scalar_lea.vmem [#allocation0], 24
    %28 = vst [vmem:[%s27] sm:%s3] %v26
    %s29 = smul.addr 4, 2
    %s30 = scalar_lea.vmem %s0, %s29
    %v31 = vld [vmem:[%s30] sm:%s3]
    %s32 = scalar_lea.vmem [#allocation0], 16
    %33 = vst [vmem:[%s32] sm:%s3] %v31
    %s34 = scalar_lea.vmem %s0, 4
    %v35 = vld [vmem:[%s34] sm:%s3]
    %s36 = scalar_lea.vmem [#allocation0], 8
    %37 = vst [vmem:[%s36] sm:%s3] %v35
    %v38 = vld [vmem:[%s0] sm:%s3]
    %39 = vst [vmem:[#allocation0] sm:%s3] %v38
    %v40 = vld [vmem:[#allocation0] ss:$8 sm:$0xf]
    %v41 = vld [vmem:[#allocation0] ss:$8 sm:$0xf0]
    %vm42 = vcmask 1047556
    %v43 = vsel %vm42, %v41, %v40
    %vm44 = vcmask 64512
    %45 = vst.msk [vmem:[%s1] sm:$0xff] %vm44, %v43
    %s46 = scalar_lea.vmem [#allocation0], 3
    %v47 = vld [vmem:[%s46] ss:$8 sm:$0xf]
    %s48 = scalar_lea.vmem [#allocation0], 3
    %v49 = vld [vmem:[%s48] ss:$8 sm:$0xf0]
    %vm50 = vcmask 1047556
    %v51 = vsel %vm50, %v49, %v47
    %52 = vrot.lane.b32.xlu0 %v51, 24
    %v53 = vpop.permute.xlu0 %52
    %vm54 = vcmask 261312
    %55 = vst.msk [vmem:[%s1] sm:$0xff] %vm54, %v53
    %s56 = scalar_lea.vmem [#allocation0], 2
    %v57 = vld [vmem:[%s56] ss:$8 sm:$0xf]
    %s58 = scalar_lea.vmem [#allocation0], 2
    %v59 = vld [vmem:[%s58] ss:$8 sm:$0xf0]
    %vm60 = vcmask 1047556
    %v61 = vsel %vm60, %v59, %v57
    %62 = vrot.lane.b32.xlu0 %v61, 16
    %v63 = vpop.permute.xlu0 %62
    %vm64 = vcmask 195712
    %65 = vst.msk [vmem:[%s1] sm:$0xff] %vm64, %v63
    %s66 = scalar_lea.vmem [#allocation0], 1
    %v67 = vld [vmem:[%s66] ss:$8 sm:$0xf]
    %s68 = scalar_lea.vmem [#allocation0], 1
    %v69 = vld [vmem:[%s68] ss:$8 sm:$0xf0]
    %vm70 = vcmask 1047556
    %v71 = vsel %vm70, %v69, %v67
    %72 = vrot.lane.b32.xlu0 %v71, 8
    %v73 = vpop.permute.xlu0 %72
    %vm74 = vcmask 130112
    %75 = vst.msk [vmem:[%s1] sm:$0xff] %vm74, %v73

// kernel: transformer_decoder_forward.1
$region0: #{transformer_decoder_forward.1}
  #allocation0 [shape = 'u32[]', space=smem, size = 0x4, offset = 0x4, fixed_abs, tag = 'smem constant byte address 0x4 - core index']
  #allocation1 [shape = 'u32[144,128]{1,0:T(1,128)}', space=vmem, size = 0x12000, scoped, tag = 'internal scratch']
  %s0 = inlined_call_operand.vmem [shape: f32[2,8,32], index: 0, kind: input, shape index: {}]
  %s1 = inlined_call_operand.vmem [shape: f32[2,48,8], index: 1, kind: input, shape index: {}]
  %s2 = inlined_call_operand.vmem [shape: f32[8,32], index: 2, kind: input, shape index: {}]
  %s3 = inlined_call_operand.vmem [shape: f32[32,32], index: 3, kind: input, shape index: {}, may-alias: {3,4}]
  %s4 = inlined_call_operand.vmem [shape: f32[32,32], index: 4, kind: input, shape index: {}, may-alias: {3,4}]
  %s5 = inlined_call_operand.vmem [shape: f32[32,96], index: 5, kind: input, shape index: {}]
  %s6 = inlined_call_operand.vmem [shape: f32[96,16], index: 6, kind: input, shape index: {}]
  %s7 = inlined_call_operand.vmem [shape: f32[96,96], index: 7, kind: input, shape index: {}]
  %s8 = inlined_call_operand.vmem [shape: f32[32,96], index: 8, kind: input, shape index: {}]
  %s9 = inlined_call_operand.vmem [shape: f32[1,96], index: 9, kind: input, shape index: {}]
  %s10 = inlined_call_operand.vmem [shape: f32[32,32], index: 10, kind: input, shape index: {}]
  %s11 = inlined_call_operand.vmem [shape: f32[1,32], index: 11, kind: input, shape index: {}]
  %s12 = inlined_call_operand.vmem [shape: f32[1,32], index: 12, kind: input, shape index: {}]
  %s13 = inlined_call_operand.vmem [shape: f32[1,32], index: 13, kind: input, shape index: {}]
  %s14 = inlined_call_operand.vmem [shape: f32[8,16], index: 14, kind: input, shape index: {}]
  %s15 = inlined_call_operand.vmem [shape: f32[1,16], index: 15, kind: input, shape index: {}]
  %s16 = inlined_call_operand.vmem [shape: f32[8,32], index: 16, kind: input, shape index: {}]
  %s17 = inlined_call_operand.vmem [shape: f32[1,32], index: 17, kind: input, shape index: {}]
  %s18 = inlined_call_operand.vmem [shape: f32[16,8], index: 18, kind: input, shape index: {}]
  %s19 = inlined_call_operand.vmem [shape: f32[1,8], index: 19, kind: input, shape index: {}]
  %s20 = inlined_call_operand.vmem [shape: f32[2,32,8], index: 20, kind: output, shape index: {}]
  %s21 = sld [smem:[#allocation0]]
  $region113: #{transformer_decoder_forward.1} parent=0
    _
  %s23 = ssub.s32 1, %s21
  %s24 = scalar_select 0, %s23, %s21
  loop: start=0, step=1, limit=4
  $region2: #{transformer_decoder_forward.1} parent=0 // loop_pre_header
    _
  $region3: #{transformer_decoder_forward.1} parent=0 // loop_header
    %s26 = sphi 0, %s30
    %p27 = scmp.ge.s32.totalorder %s26, 4
    %s36 = sphi 0, %s38
    %s39 = sphi 0, %s36
    %s40 = sphi 0, %s39
    %s56 = sphi 0, %s40
    %s62 = sphi 0, %s64
    %s65 = sphi 0, %s62
    %s66 = sphi 0, %s65
    %s82 = sphi 0, %s66
    %s86 = sphi 0, %s86
    %s88 = sphi 0, %s86
    %s89 = sphi 0, %s88
    %s103 = sphi 0, %s89
    %s107 = sphi 0, %s107
    %s109 = sphi 0, %s107
    %s110 = sphi 0, %s109
    %s124 = sphi 0, %s110
    %s128 = sphi 0, %s128
    %s130 = sphi 0, %s128
    %s131 = sphi 0, %s130
    %s145 = sphi 0, %s131
    %s149 = sphi 0, %s149
    %s151 = sphi 0, %s149
    %s152 = sphi 0, %s151
    %s166 = sphi 0, %s152
    %s170 = sphi 0, %s170
    %s172 = sphi 0, %s170
    %s173 = sphi 0, %s172
    %s187 = sphi 0, %s173
    %s191 = sphi 0, %s191
    %s193 = sphi 0, %s191
    %s194 = sphi 0, %s193
    %s208 = sphi 0, %s194
    %s212 = sphi 0, %s212
    %s214 = sphi 0, %s212
    %s215 = sphi 0, %s214
    %s229 = sphi 0, %s215
    %s233 = sphi 0, %s233
    %s235 = sphi 0, %s233
    %s236 = sphi 0, %s235
    %s250 = sphi 0, %s236
    %s254 = sphi 0, %s254
    %s256 = sphi 0, %s254
    %s257 = sphi 0, %s256
    %s271 = sphi 0, %s257
    %s275 = sphi 0, %s275
    %s277 = sphi 0, %s275
    %s278 = sphi 0, %s277
    %s292 = sphi 0, %s278
    %s296 = sphi 0, %s296
    %s298 = sphi 0, %s296
    %s299 = sphi 0, %s298
    %s313 = sphi 0, %s299
    %s317 = sphi 0, %s317
    %s319 = sphi 0, %s317
    %s320 = sphi 0, %s319
    %s334 = sphi 0, %s320
    %s338 = sphi 0, %s338
    %s340 = sphi 0, %s338
    %s341 = sphi 0, %s340
    %s355 = sphi 0, %s341
    %s359 = sphi 0, %s359
    %s361 = sphi 0, %s359
    %s362 = sphi 0, %s361
    %s376 = sphi 0, %s362
    %s380 = sphi 0, %s380
    %s382 = sphi 0, %s380
    %s383 = sphi 0, %s382
    %s397 = sphi 0, %s383
    %s401 = sphi 0, %s401
    %s403 = sphi 0, %s401
    %s404 = sphi 0, %s403
    %s418 = sphi 0, %s404
    %s422 = sphi 0, %s422
    %s424 = sphi 0, %s422
    %s425 = sphi 0, %s424
    %s439 = sphi 0, %s425
    %s443 = sphi 0, %s443
    %s445 = sphi 0, %s443
    %s446 = sphi 0, %s445
    %s460 = sphi 0, %s446
    %s466 = sphi 0, %s468
    %s469 = sphi 0, %s466
    %s470 = sphi 0, %s469
    %s486 = sphi 0, %s470
  $region4: #{transformer_decoder_forward.1} parent=0 // loop_header_branch
    %29 = sbr.rel (%p27) target = $region8
  $region5: #{transformer_decoder_forward.1} parent=0 // loop_body
    %s31 = ssub.s32 %s26, 1
    %s32 = ssub.s32 %s26, 2
    %s33 = sadd.s32 %s26, 1
    %s34 = ssub.s32 %s26, %s33
    %p35 = scmp.eq.s32.totalorder %s34, 0
    %s37 = sadd.s32 %s36, 1
    %s38 = scalar_select %p35, %s36, %s37
    %p41 = pneg %p35
    %p42 = scmp.eq.s32.totalorder %s26, 1
    %p43 = por %p41, %p42
    %p44 = scmp.ne.s32.totalorder %s36, %s39
    %p45 = scmp.eq.s32.totalorder %s26, 0
    %p46 = por %p44, %p45
    %p47 = scmp.ne.s32.totalorder %s36, %s39
    %p48 = scmp.eq.s32.totalorder %s31, 1
    %p49 = por %p47, %p48
    %p50 = scmp.ne.s32.totalorder %s39, %s40
    %p51 = scmp.eq.s32.totalorder %s31, 0
    %p52 = por %p50, %p51
    %p53 = scmp.ne.s32.totalorder %s39, %s40
    %p54 = scmp.eq.s32.totalorder %s32, 1
    %p55 = por %p53, %p54
    %p57 = scmp.ne.s32.totalorder %s40, %s56
    %p58 = scmp.eq.s32.totalorder %s32, 0
    %p59 = por %p57, %p58
    %s60 = ssub.s32 %s26, %s33
    %p61 = scmp.eq.s32.totalorder %s60, 0
    %s63 = sadd.s32 %s62, 1
    %s64 = scalar_select %p61, %s62, %s63
    %p67 = pneg %p61
    %p68 = scmp.eq.s32.totalorder %s26, 1
    %p69 = por %p67, %p68
    %p70 = scmp.ne.s32.totalorder %s62, %s65
    %p71 = scmp.eq.s32.totalorder %s26, 0
    %p72 = por %p70, %p71
    %p73 = scmp.ne.s32.totalorder %s62, %s65
    %p74 = scmp.eq.s32.totalorder %s31, 1
    %p75 = por %p73, %p74
    %p76 = scmp.ne.s32.totalorder %s65, %s66
    %p77 = scmp.eq.s32.totalorder %s31, 0
    %p78 = por %p76, %p77
    %p79 = scmp.ne.s32.totalorder %s65, %s66
    %p80 = scmp.eq.s32.totalorder %s32, 1
    %p81 = por %p79, %p80
    %p83 = scmp.ne.s32.totalorder %s66, %s82
    %p84 = scmp.eq.s32.totalorder %s32, 0
    %p85 = por %p83, %p84
    %s87 = sadd.s32 %s86, 1
    %p90 = scmp.eq.s32.totalorder %s26, 1
    %p91 = scmp.ne.s32.totalorder %s86, %s88
    %p92 = scmp.eq.s32.totalorder %s26, 0
    %p93 = por %p91, %p92
    %p94 = scmp.ne.s32.totalorder %s86, %s88
    %p95 = scmp.eq.s32.totalorder %s31, 1
    %p96 = por %p94, %p95
    %p97 = scmp.ne.s32.totalorder %s88, %s89
    %p98 = scmp.eq.s32.totalorder %s31, 0
    %p99 = por %p97, %p98
    %p100 = scmp.ne.s32.totalorder %s88, %s89
    %p101 = scmp.eq.s32.totalorder %s32, 1
    %p102 = por %p100, %p101
    %p104 = scmp.ne.s32.totalorder %s89, %s103
    %p105 = scmp.eq.s32.totalorder %s32, 0
    %p106 = por %p104, %p105
    %s108 = sadd.s32 %s107, 1
    %p111 = scmp.eq.s32.totalorder %s26, 1
    %p112 = scmp.ne.s32.totalorder %s107, %s109
    %p113 = scmp.eq.s32.totalorder %s26, 0
    %p114 = por %p112, %p113
    %p115 = scmp.ne.s32.totalorder %s107, %s109
    %p116 = scmp.eq.s32.totalorder %s31, 1
    %p117 = por %p115, %p116
    %p118 = scmp.ne.s32.totalorder %s109, %s110
    %p119 = scmp.eq.s32.totalorder %s31, 0
    %p120 = por %p118, %p119
    %p121 = scmp.ne.s32.totalorder %s109, %s110
    %p122 = scmp.eq.s32.totalorder %s32, 1
    %p123 = por %p121, %p122
    %p125 = scmp.ne.s32.totalorder %s110, %s124
    %p126 = scmp.eq.s32.totalorder %s32, 0
    %p127 = por %p125, %p126
    %s129 = sadd.s32 %s128, 1
    %p132 = scmp.eq.s32.totalorder %s26, 1
    %p133 = scmp.ne.s32.totalorder %s128, %s130
    %p134 = scmp.eq.s32.totalorder %s26, 0
    %p135 = por %p133, %p134
    %p136 = scmp.ne.s32.totalorder %s128, %s130
    %p137 = scmp.eq.s32.totalorder %s31, 1
    %p138 = por %p136, %p137
    %p139 = scmp.ne.s32.totalorder %s130, %s131
    %p140 = scmp.eq.s32.totalorder %s31, 0
    %p141 = por %p139, %p140
    %p142 = scmp.ne.s32.totalorder %s130, %s131
    %p143 = scmp.eq.s32.totalorder %s32, 1
    %p144 = por %p142, %p143
    %p146 = scmp.ne.s32.totalorder %s131, %s145
    %p147 = scmp.eq.s32.totalorder %s32, 0
    %p148 = por %p146, %p147
    %s150 = sadd.s32 %s149, 1
    %p153 = scmp.eq.s32.totalorder %s26, 1
    %p154 = scmp.ne.s32.totalorder %s149, %s151
    %p155 = scmp.eq.s32.totalorder %s26, 0
    %p156 = por %p154, %p155
    %p157 = scmp.ne.s32.totalorder %s149, %s151
    %p158 = scmp.eq.s32.totalorder %s31, 1
    %p159 = por %p157, %p158
    %p160 = scmp.ne.s32.totalorder %s151, %s152
    %p161 = scmp.eq.s32.totalorder %s31, 0
    %p162 = por %p160, %p161
    %p163 = scmp.ne.s32.totalorder %s151, %s152
    %p164 = scmp.eq.s32.totalorder %s32, 1
    %p165 = por %p163, %p164
    %p167 = scmp.ne.s32.totalorder %s152, %s166
    %p168 = scmp.eq.s32.totalorder %s32, 0
    %p169 = por %p167, %p168
    %s171 = sadd.s32 %s170, 1
    %p174 = scmp.eq.s32.totalorder %s26, 1
    %p175 = scmp.ne.s32.totalorder %s170, %s172
    %p176 = scmp.eq.s32.totalorder %s26, 0
    %p177 = por %p175, %p176
    %p178 = scmp.ne.s32.totalorder %s170, %s172
    %p179 = scmp.eq.s32.totalorder %s31, 1
    %p180 = por %p178, %p179
    %p181 = scmp.ne.s32.totalorder %s172, %s173
    %p182 = scmp.eq.s32.totalorder %s31, 0
    %p183 = por %p181, %p182
    %p184 = scmp.ne.s32.totalorder %s172, %s173
    %p185 = scmp.eq.s32.totalorder %s32, 1
    %p186 = por %p184, %p185
    %p188 = scmp.ne.s32.totalorder %s173, %s187
    %p189 = scmp.eq.s32.totalorder %s32, 0
    %p190 = por %p188, %p189
    %s192 = sadd.s32 %s191, 1
    %p195 = scmp.eq.s32.totalorder %s26, 1
    %p196 = scmp.ne.s32.totalorder %s191, %s193
    %p197 = scmp.eq.s32.totalorder %s26, 0
    %p198 = por %p196, %p197
    %p199 = scmp.ne.s32.totalorder %s191, %s193
    %p200 = scmp.eq.s32.totalorder %s31, 1
    %p201 = por %p199, %p200
    %p202 = scmp.ne.s32.totalorder %s193, %s194
    %p203 = scmp.eq.s32.totalorder %s31, 0
    %p204 = por %p202, %p203
    %p205 = scmp.ne.s32.totalorder %s193, %s194
    %p206 = scmp.eq.s32.totalorder %s32, 1
    %p207 = por %p205, %p206
    %p209 = scmp.ne.s32.totalorder %s194, %s208
    %p210 = scmp.eq.s32.totalorder %s32, 0
    %p211 = por %p209, %p210
    %s213 = sadd.s32 %s212, 1
    %p216 = scmp.eq.s32.totalorder %s26, 1
    %p217 = scmp.ne.s32.totalorder %s212, %s214
    %p218 = scmp.eq.s32.totalorder %s26, 0
    %p219 = por %p217, %p218
    %p220 = scmp.ne.s32.totalorder %s212, %s214
    %p221 = scmp.eq.s32.totalorder %s31, 1
    %p222 = por %p220, %p221
    %p223 = scmp.ne.s32.totalorder %s214, %s215
    %p224 = scmp.eq.s32.totalorder %s31, 0
    %p225 = por %p223, %p224
    %p226 = scmp.ne.s32.totalorder %s214, %s215
    %p227 = scmp.eq.s32.totalorder %s32, 1
    %p228 = por %p226, %p227
    %p230 = scmp.ne.s32.totalorder %s215, %s229
    %p231 = scmp.eq.s32.totalorder %s32, 0
    %p232 = por %p230, %p231
    %s234 = sadd.s32 %s233, 1
    %p237 = scmp.eq.s32.totalorder %s26, 1
    %p238 = scmp.ne.s32.totalorder %s233, %s235
    %p239 = scmp.eq.s32.totalorder %s26, 0
    %p240 = por %p238, %p239
    %p241 = scmp.ne.s32.totalorder %s233, %s235
    %p242 = scmp.eq.s32.totalorder %s31, 1
    %p243 = por %p241, %p242
    %p244 = scmp.ne.s32.totalorder %s235, %s236
    %p245 = scmp.eq.s32.totalorder %s31, 0
    %p246 = por %p244, %p245
    %p247 = scmp.ne.s32.totalorder %s235, %s236
    %p248 = scmp.eq.s32.totalorder %s32, 1
    %p249 = por %p247, %p248
    %p251 = scmp.ne.s32.totalorder %s236, %s250
    %p252 = scmp.eq.s32.totalorder %s32, 0
    %p253 = por %p251, %p252
    %s255 = sadd.s32 %s254, 1
    %p258 = scmp.eq.s32.totalorder %s26, 1
    %p259 = scmp.ne.s32.totalorder %s254, %s256
    %p260 = scmp.eq.s32.totalorder %s26, 0
    %p261 = por %p259, %p260
    %p262 = scmp.ne.s32.totalorder %s254, %s256
    %p263 = scmp.eq.s32.totalorder %s31, 1
    %p264 = por %p262, %p263
    %p265 = scmp.ne.s32.totalorder %s256, %s257
    %p266 = scmp.eq.s32.totalorder %s31, 0
    %p267 = por %p265, %p266
    %p268 = scmp.ne.s32.totalorder %s256, %s257
    %p269 = scmp.eq.s32.totalorder %s32, 1
    %p270 = por %p268, %p269
    %p272 = scmp.ne.s32.totalorder %s257, %s271
    %p273 = scmp.eq.s32.totalorder %s32, 0
    %p274 = por %p272, %p273
    %s276 = sadd.s32 %s275, 1
    %p279 = scmp.eq.s32.totalorder %s26, 1
    %p280 = scmp.ne.s32.totalorder %s275, %s277
    %p281 = scmp.eq.s32.totalorder %s26, 0
    %p282 = por %p280, %p281
    %p283 = scmp.ne.s32.totalorder %s275, %s277
    %p284 = scmp.eq.s32.totalorder %s31, 1
    %p285 = por %p283, %p284
    %p286 = scmp.ne.s32.totalorder %s277, %s278
    %p287 = scmp.eq.s32.totalorder %s31, 0
    %p288 = por %p286, %p287
    %p289 = scmp.ne.s32.totalorder %s277, %s278
    %p290 = scmp.eq.s32.totalorder %s32, 1
    %p291 = por %p289, %p290
    %p293 = scmp.ne.s32.totalorder %s278, %s292
    %p294 = scmp.eq.s32.totalorder %s32, 0
    %p295 = por %p293, %p294
    %s297 = sadd.s32 %s296, 1
    %p300 = scmp.eq.s32.totalorder %s26, 1
    %p301 = scmp.ne.s32.totalorder %s296, %s298
    %p302 = scmp.eq.s32.totalorder %s26, 0
    %p303 = por %p301, %p302
    %p304 = scmp.ne.s32.totalorder %s296, %s298
    %p305 = scmp.eq.s32.totalorder %s31, 1
    %p306 = por %p304, %p305
    %p307 = scmp.ne.s32.totalorder %s298, %s299
    %p308 = scmp.eq.s32.totalorder %s31, 0
    %p309 = por %p307, %p308
    %p310 = scmp.ne.s32.totalorder %s298, %s299
    %p311 = scmp.eq.s32.totalorder %s32, 1
    %p312 = por %p310, %p311
    %p314 = scmp.ne.s32.totalorder %s299, %s313
    %p315 = scmp.eq.s32.totalorder %s32, 0
    %p316 = por %p314, %p315
    %s318 = sadd.s32 %s317, 1
    %p321 = scmp.eq.s32.totalorder %s26, 1
    %p322 = scmp.ne.s32.totalorder %s317, %s319
    %p323 = scmp.eq.s32.totalorder %s26, 0
    %p324 = por %p322, %p323
    %p325 = scmp.ne.s32.totalorder %s317, %s319
    %p326 = scmp.eq.s32.totalorder %s31, 1
    %p327 = por %p325, %p326
    %p328 = scmp.ne.s32.totalorder %s319, %s320
    %p329 = scmp.eq.s32.totalorder %s31, 0
    %p330 = por %p328, %p329
    %p331 = scmp.ne.s32.totalorder %s319, %s320
    %p332 = scmp.eq.s32.totalorder %s32, 1
    %p333 = por %p331, %p332
    %p335 = scmp.ne.s32.totalorder %s320, %s334
    %p336 = scmp.eq.s32.totalorder %s32, 0
    %p337 = por %p335, %p336
    %s339 = sadd.s32 %s338, 1
    %p342 = scmp.eq.s32.totalorder %s26, 1
    %p343 = scmp.ne.s32.totalorder %s338, %s340
    %p344 = scmp.eq.s32.totalorder %s26, 0
    %p345 = por %p343, %p344
    %p346 = scmp.ne.s32.totalorder %s338, %s340
    %p347 = scmp.eq.s32.totalorder %s31, 1
    %p348 = por %p346, %p347
    %p349 = scmp.ne.s32.totalorder %s340, %s341
    %p350 = scmp.eq.s32.totalorder %s31, 0
    %p351 = por %p349, %p350
    %p352 = scmp.ne.s32.totalorder %s340, %s341
    %p353 = scmp.eq.s32.totalorder %s32, 1
    %p354 = por %p352, %p353
    %p356 = scmp.ne.s32.totalorder %s341, %s355
    %p357 = scmp.eq.s32.totalorder %s32, 0
    %p358 = por %p356, %p357
    %s360 = sadd.s32 %s359, 1
    %p363 = scmp.eq.s32.totalorder %s26, 1
    %p364 = scmp.ne.s32.totalorder %s359, %s361
    %p365 = scmp.eq.s32.totalorder %s26, 0
    %p366 = por %p364, %p365
    %p367 = scmp.ne.s32.totalorder %s359, %s361
    %p368 = scmp.eq.s32.totalorder %s31, 1
    %p369 = por %p367, %p368
    %p370 = scmp.ne.s32.totalorder %s361, %s362
    %p371 = scmp.eq.s32.totalorder %s31, 0
    %p372 = por %p370, %p371
    %p373 = scmp.ne.s32.totalorder %s361, %s362
    %p374 = scmp.eq.s32.totalorder %s32, 1
    %p375 = por %p373, %p374
    %p377 = scmp.ne.s32.totalorder %s362, %s376
    %p378 = scmp.eq.s32.totalorder %s32, 0
    %p379 = por %p377, %p378
    %s381 = sadd.s32 %s380, 1
    %p384 = scmp.eq.s32.totalorder %s26, 1
    %p385 = scmp.ne.s32.totalorder %s380, %s382
    %p386 = scmp.eq.s32.totalorder %s26, 0
    %p387 = por %p385, %p386
    %p388 = scmp.ne.s32.totalorder %s380, %s382
    %p389 = scmp.eq.s32.totalorder %s31, 1
    %p390 = por %p388, %p389
    %p391 = scmp.ne.s32.totalorder %s382, %s383
    %p392 = scmp.eq.s32.totalorder %s31, 0
    %p393 = por %p391, %p392
    %p394 = scmp.ne.s32.totalorder %s382, %s383
    %p395 = scmp.eq.s32.totalorder %s32, 1
    %p396 = por %p394, %p395
    %p398 = scmp.ne.s32.totalorder %s383, %s397
    %p399 = scmp.eq.s32.totalorder %s32, 0
    %p400 = por %p398, %p399
    %s402 = sadd.s32 %s401, 1
    %p405 = scmp.eq.s32.totalorder %s26, 1
    %p406 = scmp.ne.s32.totalorder %s401, %s403
    %p407 = scmp.eq.s32.totalorder %s26, 0
    %p408 = por %p406, %p407
    %p409 = scmp.ne.s32.totalorder %s401, %s403
    %p410 = scmp.eq.s32.totalorder %s31, 1
    %p411 = por %p409, %p410
    %p412 = scmp.ne.s32.totalorder %s403, %s404
    %p413 = scmp.eq.s32.totalorder %s31, 0
    %p414 = por %p412, %p413
    %p415 = scmp.ne.s32.totalorder %s403, %s404
    %p416 = scmp.eq.s32.totalorder %s32, 1
    %p417 = por %p415, %p416
    %p419 = scmp.ne.s32.totalorder %s404, %s418
    %p420 = scmp.eq.s32.totalorder %s32, 0
    %p421 = por %p419, %p420
    %s423 = sadd.s32 %s422, 1
    %p426 = scmp.eq.s32.totalorder %s26, 1
    %p427 = scmp.ne.s32.totalorder %s422, %s424
    %p428 = scmp.eq.s32.totalorder %s26, 0
    %p429 = por %p427, %p428
    %p430 = scmp.ne.s32.totalorder %s422, %s424
    %p431 = scmp.eq.s32.totalorder %s31, 1
    %p432 = por %p430, %p431
    %p433 = scmp.ne.s32.totalorder %s424, %s425
    %p434 = scmp.eq.s32.totalorder %s31, 0
    %p435 = por %p433, %p434
    %p436 = scmp.ne.s32.totalorder %s424, %s425
    %p437 = scmp.eq.s32.totalorder %s32, 1
    %p438 = por %p436, %p437
    %p440 = scmp.ne.s32.totalorder %s425, %s439
    %p441 = scmp.eq.s32.totalorder %s32, 0
    %p442 = por %p440, %p441
    %s444 = sadd.s32 %s443, 1
    %p447 = scmp.eq.s32.totalorder %s26, 1
    %p448 = scmp.ne.s32.totalorder %s443, %s445
    %p449 = scmp.eq.s32.totalorder %s26, 0
    %p450 = por %p448, %p449
    %p451 = scmp.ne.s32.totalorder %s443, %s445
    %p452 = scmp.eq.s32.totalorder %s31, 1
    %p453 = por %p451, %p452
    %p454 = scmp.ne.s32.totalorder %s445, %s446
    %p455 = scmp.eq.s32.totalorder %s31, 0
    %p456 = por %p454, %p455
    %p457 = scmp.ne.s32.totalorder %s445, %s446
    %p458 = scmp.eq.s32.totalorder %s32, 1
    %p459 = por %p457, %p458
    %p461 = scmp.ne.s32.totalorder %s446, %s460
    %p462 = scmp.eq.s32.totalorder %s32, 0
    %p463 = por %p461, %p462
    %s464 = ssub.s32 %s26, %s33
    %p465 = scmp.eq.s32.totalorder %s464, 0
    %s467 = sadd.s32 %s466, 1
    %s468 = scalar_select %p465, %s466, %s467
    %p471 = pneg %p465
    %p472 = scmp.eq.s32.totalorder %s26, 1
    %p473 = por %p471, %p472
    %p474 = scmp.ne.s32.totalorder %s466, %s469
    %p475 = scmp.eq.s32.totalorder %s26, 0
    %p476 = por %p474, %p475
    %p477 = scmp.ne.s32.totalorder %s466, %s469
    %p478 = scmp.eq.s32.totalorder %s31, 1
    %p479 = por %p477, %p478
    %p480 = scmp.ne.s32.totalorder %s469, %s470
    %p481 = scmp.eq.s32.totalorder %s31, 0
    %p482 = por %p480, %p481
    %p483 = scmp.ne.s32.totalorder %s469, %s470
    %p484 = scmp.eq.s32.totalorder %s32, 1
    %p485 = por %p483, %p484
    %p487 = scmp.ne.s32.totalorder %s470, %s486
    %p488 = scmp.eq.s32.totalorder %s32, 0
    %p489 = por %p487, %p488
    %p490 = scmp.le.s32.totalorder 1, %s26
    %p491 = scmp.lt.s32.totalorder %s26, 3
    %p492 = pnand %p490, %p491
    %p493 = pneg %p492
    // Predicated region
    $region9: #{transformer_decoder_forward.1} parent=5 // pred_check
      _
    $region10: #{transformer_decoder_forward.1} parent=5 // pred_check_branch
      %495 = sbr.rel (%p492) target = $region12
    $region11: #{transformer_decoder_forward.1} parent=5 // pred_region
      %s496 = ssub.s32 %s26, 1
      // Predicated region
      $region13: #{transformer_decoder_forward.1} parent=11 // pred_check
        %p497 = pneg %p99
      $region14: #{transformer_decoder_forward.1} parent=11 // pred_check_branch
        %499 = sbr.rel (%p497) target = $region16
      $region15: #{transformer_decoder_forward.1} parent=11 // pred_region
        _
      $region16: #{transformer_decoder_forward.1} parent=11 // pred_fallthru
        _
      // Predicated region
      $region17: #{transformer_decoder_forward.1} parent=11 // pred_check
        %p500 = pneg %p120
      $region18: #{transformer_decoder_forward.1} parent=11 // pred_check_branch
        %502 = sbr.rel (%p500) target = $region20
      $region19: #{transformer_decoder_forward.1} parent=11 // pred_region
        _
      $region20: #{transformer_decoder_forward.1} parent=11 // pred_fallthru
        _
      // Predicated region
      $region21: #{transformer_decoder_forward.1} parent=11 // pred_check
        %p503 = pneg %p141
      $region22: #{transformer_decoder_forward.1} parent=11 // pred_check_branch
        %505 = sbr.rel (%p503) target = $region24
      $region23: #{transformer_decoder_forward.1} parent=11 // pred_region
        _
      $region24: #{transformer_decoder_forward.1} parent=11 // pred_fallthru
        _
      // Predicated region
      $region25: #{transformer_decoder_forward.1} parent=11 // pred_check
        %p506 = pneg %p162
      $region26: #{transformer_decoder_forward.1} parent=11 // pred_check_branch
        %508 = sbr.rel (%p506) target = $region28
      $region27: #{transformer_decoder_forward.1} parent=11 // pred_region
        _
      $region28: #{transformer_decoder_forward.1} parent=11 // pred_fallthru
        _
      // Predicated region
      $region29: #{transformer_decoder_forward.1} parent=11 // pred_check
        %p509 = pneg %p183
      $region30: #{transformer_decoder_forward.1} parent=11 // pred_check_branch
        %511 = sbr.rel (%p509) target = $region32
      $region31: #{transformer_decoder_forward.1} parent=11 // pred_region
        _
      $region32: #{transformer_decoder_forward.1} parent=11 // pred_fallthru
        _
      // Predicated region
      $region33: #{transformer_decoder_forward.1} parent=11 // pred_check
        %p512 = pneg %p204
      $region34: #{transformer_decoder_forward.1} parent=11 // pred_check_branch
        %514 = sbr.rel (%p512) target = $region36
      $region35: #{transformer_decoder_forward.1} parent=11 // pred_region
        _
      $region36: #{transformer_decoder_forward.1} parent=11 // pred_fallthru
        _
      // Predicated region
      $region37: #{transformer_decoder_forward.1} parent=11 // pred_check
        %p515 = pneg %p225
      $region38: #{transformer_decoder_forward.1} parent=11 // pred_check_branch
        %517 = sbr.rel (%p515) target = $region40
      $region39: #{transformer_decoder_forward.1} parent=11 // pred_region
        _
      $region40: #{transformer_decoder_forward.1} parent=11 // pred_fallthru
        _
      // Predicated region
      $region41: #{transformer_decoder_forward.1} parent=11 // pred_check
        %p518 = pneg %p246
      $region42: #{transformer_decoder_forward.1} parent=11 // pred_check_branch
        %520 = sbr.rel (%p518) target = $region44
      $region43: #{transformer_decoder_forward.1} parent=11 // pred_region
        _
      $region44: #{transformer_decoder_forward.1} parent=11 // pred_fallthru
        _
      // Predicated region
      $region45: #{transformer_decoder_forward.1} parent=11 // pred_check
        %p521 = pneg %p267
      $region46: #{transformer_decoder_forward.1} parent=11 // pred_check_branch
        %523 = sbr.rel (%p521) target = $region48
      $region47: #{transformer_decoder_forward.1} parent=11 // pred_region
        _
      $region48: #{transformer_decoder_forward.1} parent=11 // pred_fallthru
        _
      // Predicated region
      $region49: #{transformer_decoder_forward.1} parent=11 // pred_check
        %p524 = pneg %p288
      $region50: #{transformer_decoder_forward.1} parent=11 // pred_check_branch
        %526 = sbr.rel (%p524) target = $region52
      $region51: #{transformer_decoder_forward.1} parent=11 // pred_region
        _
      $region52: #{transformer_decoder_forward.1} parent=11 // pred_fallthru
        _
      // Predicated region
      $region53: #{transformer_decoder_forward.1} parent=11 // pred_check
        %p527 = pneg %p309
      $region54: #{transformer_decoder_forward.1} parent=11 // pred_check_branch
        %529 = sbr.rel (%p527) target = $region56
      $region55: #{transformer_decoder_forward.1} parent=11 // pred_region
        _
      $region56: #{transformer_decoder_forward.1} parent=11 // pred_fallthru
        _
      // Predicated region
      $region57: #{transformer_decoder_forward.1} parent=11 // pred_check
        %p530 = pneg %p330
      $region58: #{transformer_decoder_forward.1} parent=11 // pred_check_branch
        %532 = sbr.rel (%p530) target = $region60
      $region59: #{transformer_decoder_forward.1} parent=11 // pred_region
        _
      $region60: #{transformer_decoder_forward.1} parent=11 // pred_fallthru
        _
      // Predicated region
      $region61: #{transformer_decoder_forward.1} parent=11 // pred_check
        %p533 = pneg %p351
      $region62: #{transformer_decoder_forward.1} parent=11 // pred_check_branch
        %535 = sbr.rel (%p533) target = $region64
      $region63: #{transformer_decoder_forward.1} parent=11 // pred_region
        _
      $region64: #{transformer_decoder_forward.1} parent=11 // pred_fallthru
        _
      // Predicated region
      $region65: #{transformer_decoder_forward.1} parent=11 // pred_check
        %p536 = pneg %p372
      $region66: #{transformer_decoder_forward.1} parent=11 // pred_check_branch
        %538 = sbr.rel (%p536) target = $region68
      $region67: #{transformer_decoder_forward.1} parent=11 // pred_region
        _
      $region68: #{transformer_decoder_forward.1} parent=11 // pred_fallthru
        _
      // Predicated region
      $region69: #{transformer_decoder_forward.1} parent=11 // pred_check
        %p539 = pneg %p393
      $region70: #{transformer_decoder_forward.1} parent=11 // pred_check_branch
        %541 = sbr.rel (%p539) target = $region72
      $region71: #{transformer_decoder_forward.1} parent=11 // pred_region
        _
      $region72: #{transformer_decoder_forward.1} parent=11 // pred_fallthru
        _
      // Predicated region
      $region73: #{transformer_decoder_forward.1} parent=11 // pred_check
        %p542 = pneg %p414
      $region74: #{transformer_decoder_forward.1} parent=11 // pred_check_branch
        %544 = sbr.rel (%p542) target = $region76
      $region75: #{transformer_decoder_forward.1} parent=11 // pred_region
        _
      $region76: #{transformer_decoder_forward.1} parent=11 // pred_fallthru
        _
      // Predicated region
      $region77: #{transformer_decoder_forward.1} parent=11 // pred_check
        %p545 = pneg %p435
      $region78: #{transformer_decoder_forward.1} parent=11 // pred_check_branch
        %547 = sbr.rel (%p545) target = $region80
      $region79: #{transformer_decoder_forward.1} parent=11 // pred_region
        _
      $region80: #{transformer_decoder_forward.1} parent=11 // pred_fallthru
        _
      // Predicated region
      $region81: #{transformer_decoder_forward.1} parent=11 // pred_check
        %p548 = pneg %p456
      $region82: #{transformer_decoder_forward.1} parent=11 // pred_check_branch
        %550 = sbr.rel (%p548) target = $region84
      $region83: #{transformer_decoder_forward.1} parent=11 // pred_region
        _
      $region84: #{transformer_decoder_forward.1} parent=11 // pred_fallthru
        _
    $region12: #{transformer_decoder_forward.1} parent=5 // pred_fallthru
      _
    %p551 = scmp.lt.s32.totalorder %s26, 2
    // Predicated region
    $region85: #{transformer_decoder_forward.1} parent=5 // pred_check
      %p552 = pneg %p551
    $region86: #{transformer_decoder_forward.1} parent=5 // pred_check_branch
      %554 = sbr.rel (%p552) target = $region88
    $region87: #{transformer_decoder_forward.1} parent=5 // pred_region
      // Predicated region
      $region89: #{transformer_decoder_forward.1} parent=87 // pred_check
        %p555 = pneg %p46
      $region90: #{transformer_decoder_forward.1} parent=87 // pred_check_branch
        %557 = sbr.rel (%p555) target = $region92
      $region91: #{transformer_decoder_forward.1} parent=87 // pred_region
        %p558 = scmp.lt.s32.totalorder %s26, 1
        %s559 = scalar_select %p558, %s26, 1
        %s560 = smul.addr %s559, 8
        %s561 = scalar_lea.vmem %s0, %s560
      $region92: #{transformer_decoder_forward.1} parent=87 // pred_fallthru
        _
      // Predicated region
      $region93: #{transformer_decoder_forward.1} parent=87 // pred_check
        %p562 = pneg %p72
      $region94: #{transformer_decoder_forward.1} parent=87 // pred_check_branch
        %564 = sbr.rel (%p562) target = $region96
      $region95: #{transformer_decoder_forward.1} parent=87 // pred_region
        %p565 = scmp.lt.s32.totalorder %s26, 1
        %s566 = scalar_select %p565, %s26, 1
        %s567 = smul.addr %s566, 6
        %s568 = smul.addr %s567, 8
        %s569 = scalar_lea.vmem %s1, %s568
      $region96: #{transformer_decoder_forward.1} parent=87 // pred_fallthru
        _
    $region88: #{transformer_decoder_forward.1} parent=5 // pred_fallthru
      _
    %p570 = scmp.le.s32.totalorder 1, %s26
    %p571 = scmp.lt.s32.totalorder %s26, 3
    %p572 = pnand %p570, %p571
    %p573 = pneg %p572
    // Predicated region
    $region97: #{transformer_decoder_forward.1} parent=5 // pred_check
      _
    $region98: #{transformer_decoder_forward.1} parent=5 // pred_check_branch
      %575 = sbr.rel (%p572) target = $region100
    $region99: #{transformer_decoder_forward.1} parent=5 // pred_region
      %s576 = ssub.s32 %s26, 1
      %p577 = scmp.lt.s32.totalorder %s31, 1
      %s578 = scalar_select %p577, %s31, 1
      %s579 = smul.addr %s578, 8
      %s580 = scalar_lea.vmem %s0, %s579
      %p581 = pneg %p52
      %p582 = pneg %p49
      %p583 = scmp.lt.s32.totalorder %s31, 1
      %s584 = scalar_select %p583, %s31, 1
      %s585 = smul.addr %s584, 6
      %s586 = smul.addr %s585, 8
      %s587 = scalar_lea.vmem %s1, %s586
      %p588 = pneg %p78
      %p589 = pneg %p75
      %p590 = pneg %p99
      %p591 = pneg %p96
      %p592 = pneg %p120
      %p593 = pneg %p117
      %p594 = pneg %p141
      %p595 = pneg %p138
      %p596 = pneg %p162
      %p597 = pneg %p159
      %p598 = pneg %p183
      %p599 = pneg %p180
      %p600 = pneg %p204
      %p601 = pneg %p201
      %p602 = pneg %p225
      %p603 = pneg %p222
      %p604 = pneg %p246
      %p605 = pneg %p243
      %p606 = pneg %p267
      %p607 = pneg %p264
      %p608 = pneg %p288
      %p609 = pneg %p285
      %p610 = pneg %p309
      %p611 = pneg %p306
      %p612 = pneg %p330
      %p613 = pneg %p327
      %p614 = pneg %p351
      %p615 = pneg %p348
      %p616 = pneg %p372
      %p617 = pneg %p369
      %p618 = pneg %p393
      %p619 = pneg %p390
      %p620 = pneg %p414
      %p621 = pneg %p411
      %p622 = pneg %p435
      %p623 = pneg %p432
      %p624 = pneg %p456
      %p625 = pneg %p453
      %p626 = pneg %p482
      %p627 = pneg %p479
      %p628 = scmp.lt.s32.totalorder %s31, 1
      %s629 = scalar_select %p628, %s31, 1
      %s630 = smul.addr %s629, 4
      %s631 = smul.addr %s630, 8
      %s632 = scalar_lea.vmem %s20, %s631
      %p633 = scmp.lt.s32.totalorder %s31, 1
      %s634 = scalar_select %p633, %s31, 1
      %s635 = smul.addr %s634, 8
      %s636 = scalar_lea.vmem %s0, %s635
      %p637 = scmp.lt.s32.totalorder %s31, 1
      %s638 = scalar_select %p637, %s31, 1
      %s639 = smul.addr %s638, 6
      %s640 = smul.addr %s639, 8
      %s641 = scalar_lea.vmem %s1, %s640
      %p642 = scmp.lt.s32.totalorder %s31, 1
      %s643 = scalar_select %p642, %s31, 1
      %s644 = smul.addr %s643, 4
      %s645 = smul.addr %s644, 8
      %s646 = scalar_lea.vmem %s20, %s645
      %v647 = vld [vmem:[%s636] sm:$0xff]
      %v648 = vld [vmem:[%s8] sm:$0xff]
      %v649 = vld [vmem:[%s8 + $0x8] sm:$0xff]
      %v650 = vld [vmem:[%s8 + $0x10] sm:$0xff]
      %v651 = vld [vmem:[%s8 + $0x18] sm:$0xff]
      %v652 = vld [vmem:[%s9] sm:$0x1]
      %v654 = vlaneseq
      %v655 = vshrl.u32 %v654, 7
      %v656 = vsub.s32 0, %v655
      %v657 = vrot.slane %v652, %v656
      %vm659 = vcmask 261120
      %v661 = vsel %vm659, %v647, 0
      %663 = vmatprep.subr.mxu0 0.0
      %664 = vmatpush1.msra.mxu0 %v648
      %665 = vmatprep.subr.mxu0 0.0
      %666 = vmatpush1.msra.mxu0 %v649
      %667 = vmatprep.subr.mxu0 0.0
      %668 = vmatpush1.msra.mxu0 %v650
      %669 = vmatprep.subr.mxu0 0.0
      %670 = vmatpush1.msra.mxu0 %v651
      %671 = vmatprep.subr.mxu0 0.0
      %672 = vmatpush1.msra.mxu0 0.0
      %673 = vmatprep.subr.mxu0 0.0
      %674 = vmatpush1.msra.mxu0 0.0
      %675 = vmatprep.subr.mxu0 0.0
      %676 = vmatpush1.msra.mxu0 0.0
      %677 = vmatprep.subr.mxu0 0.0
      %678 = vmatpush1.msra.mxu0 0.0
      %679 = vmatprep.subr.mxu0 0.0
      %680 = vmatpush1.msra.mxu0 0.0
      %681 = vmatprep.subr.mxu0 0.0
      %682 = vmatpush1.msra.mxu0 0.0
      %683 = vmatprep.subr.mxu0 0.0
      %684 = vmatpush1.msra.mxu0 0.0
      %685 = vmatprep.subr.mxu0 0.0
      %686 = vmatpush1.msra.mxu0 0.0
      %687 = vmatprep.subr.mxu0 0.0
      %688 = vmatpush1.msra.mxu0 0.0
      %689 = vmatprep.subr.mxu0 0.0
      %690 = vmatpush1.msra.mxu0 0.0
      %691 = vmatprep.subr.mxu0 0.0
      %692 = vmatpush1.msra.mxu0 0.0
      %693 = vmatprep.subr.mxu0 0.0
      %694 = vmatpush1.msra.mxu0 0.0
      %695 = vmatprep.subr.mxu0 0.0
      %696 = vmatpush1.msra.mxu0 0.0
      %697 = vmatprep.subr.mxu0 0.0
      %698 = vmatpush1.msra.mxu0 0.0
      %699 = vmatprep.subr.mxu0 0.0
      %700 = vmatpush1.msra.mxu0 0.0
      %701 = vmatprep.subr.mxu0 0.0
      %702 = vmatpush1.msra.mxu0 0.0
      %703 = vmatprep.subr.mxu0 0.0
      %704 = vmatpush1.msra.mxu0 0.0
      %705 = vmatprep.subr.mxu0 0.0
      %706 = vmatpush1.msra.mxu0 0.0
      %707 = vmatprep.subr.mxu0 0.0
      %708 = vmatpush1.msra.mxu0 0.0
      %709 = vmatprep.subr.mxu0 0.0
      %710 = vmatpush1.msra.mxu0 0.0
      %711 = vmatprep.subr.mxu0 0.0
      %712 = vmatpush1.msra.mxu0 0.0
      %713 = vmatprep.subr.mxu0 0.0
      %714 = vmatpush1.msra.mxu0 0.0
      %715 = vmatprep.subr.mxu0 0.0
      %716 = vmatpush1.msra.mxu0 0.0
      %717 = vmatprep.subr.mxu0 0.0
      %718 = vmatpush1.msra.mxu0 0.0
      %719 = vmatprep.subr.mxu0 0.0
      %720 = vmatpush1.msra.mxu0 0.0
      %721 = vmatprep.subr.mxu0 0.0
      %722 = vmatpush1.msra.mxu0 0.0
      %723 = vmatprep.subr.mxu0 0.0
      %724 = vmatpush1.msra.mxu0 0.0
      %725 = vmatprep.subr.mxu0 0.0
      %726 = vmatpush1.msra.mxu0 0.0
      %727 = vmatprep.mubr.f32.mxu0 0.0
      %728 = vmatmul.mubr.f32.gmra.mrb[0].mxu0 %v661
      %v729 = vpop.f32.mrb[0].mxu0
      %v730 = vadd.f32 %v657, %v729
      %v731 = vpop.f32.mrb[0].mxu0
      %732 = vdwg.mxu0
      %v733 = vld [vmem:[%s3] sm:$0xff]
      %v734 = vld [vmem:[%s3 + $0x8] sm:$0xff]
      %v735 = vld [vmem:[%s3 + $0x10] sm:$0xff]
      %v736 = vld [vmem:[%s3 + $0x18] sm:$0xff]
      %741 = vrot.lane.b32.xlu0 %v733, 32
      %v742 = vpop.permute.xlu0 %741
      %743 = vrot.lane.b32.xlu0 %v734, 32
      %v744 = vpop.permute.xlu0 %743
      %745 = vrot.lane.b32.xlu0 %v735, 32
      %v746 = vpop.permute.xlu0 %745
      %747 = vrot.lane.b32.xlu0 %v736, 32
      %v748 = vpop.permute.xlu0 %747
      %v753 = vmul.f32 %v730, %v742
      %v754 = vmul.f32 %v730, %v744
      %v755 = vmul.f32 %v730, %v746
      %v756 = vmul.f32 %v730, %v748
      %757 = vrot.lane.b32.xlu0 %v733, 64
      %v758 = vpop.permute.xlu0 %757
      %759 = vrot.lane.b32.xlu0 %v734, 64
      %v760 = vpop.permute.xlu0 %759
      %761 = vrot.lane.b32.xlu0 %v735, 64
      %v762 = vpop.permute.xlu0 %761
      %763 = vrot.lane.b32.xlu0 %v736, 64
      %v764 = vpop.permute.xlu0 %763
      %v769 = vmul.f32 %v730, %v758
      %v770 = vmul.f32 %v730, %v760
      %v771 = vmul.f32 %v730, %v762
      %v772 = vmul.f32 %v730, %v764
      %777 = vrot.lane.b32.xlu0 %v753, 96
      %v778 = vpop.permute.xlu0 %777
      %779 = vrot.lane.b32.xlu0 %v754, 96
      %v780 = vpop.permute.xlu0 %779
      %781 = vrot.lane.b32.xlu0 %v755, 96
      %v782 = vpop.permute.xlu0 %781
      %783 = vrot.lane.b32.xlu0 %v756, 96
      %v784 = vpop.permute.xlu0 %783
      %v786 = vsel %vm659, %v730, 0
      %v788 = vsel %vm659, %v778, 0
      %v790 = vsel %vm659, %v780, 0
      %v792 = vsel %vm659, %v782, 0
      %v794 = vsel %vm659, %v784, 0
      %796 = vmatprep.subr.mxu0 0.0
      %797 = vmatpush1.xpose.msra.mxu0 %v788
      %798 = vmatprep.subr.mxu0 0.0
      %799 = vmatpush1.xpose.msra.mxu0 %v790
      %800 = vmatprep.subr.mxu0 0.0
      %801 = vmatpush1.xpose.msra.mxu0 %v792
      %802 = vmatprep.subr.mxu0 0.0
      %803 = vmatpush1.xpose.msra.mxu0 %v794
      %804 = vmatprep.subr.mxu0 0.0
      %805 = vmatpush1.xpose.msra.mxu0 0.0
      %806 = vmatprep.subr.mxu0 0.0
      %807 = vmatpush1.xpose.msra.mxu0 0.0
      %808 = vmatprep.subr.mxu0 0.0
      %809 = vmatpush1.xpose.msra.mxu0 0.0
      %810 = vmatprep.subr.mxu0 0.0
      %811 = vmatpush1.xpose.msra.mxu0 0.0
      %812 = vmatprep.subr.mxu0 0.0
      %813 = vmatpush1.xpose.msra.mxu0 0.0
      %814 = vmatprep.subr.mxu0 0.0
      %815 = vmatpush1.xpose.msra.mxu0 0.0
      %816 = vmatprep.subr.mxu0 0.0
      %817 = vmatpush1.xpose.msra.mxu0 0.0
      %818 = vmatprep.subr.mxu0 0.0
      %819 = vmatpush1.xpose.msra.mxu0 0.0
      %820 = vmatprep.subr.mxu0 0.0
      %821 = vmatpush1.xpose.msra.mxu0 0.0
      %822 = vmatprep.subr.mxu0 0.0
      %823 = vmatpush1.xpose.msra.mxu0 0.0
      %824 = vmatprep.subr.mxu0 0.0
      %825 = vmatpush1.xpose.msra.mxu0 0.0
      %826 = vmatprep.subr.mxu0 0.0
      %827 = vmatpush1.xpose.msra.mxu0 0.0
      %828 = vmatprep.subr.mxu0 0.0
      %829 = vmatpush1.xpose.msra.mxu0 0.0
      %830 = vmatprep.subr.mxu0 0.0
      %831 = vmatpush1.xpose.msra.mxu0 0.0
      %832 = vmatprep.subr.mxu0 0.0
      %833 = vmatpush1.xpose.msra.mxu0 0.0
      %834 = vmatprep.subr.mxu0 0.0
      %835 = vmatpush1.xpose.msra.mxu0 0.0
      %836 = vmatprep.subr.mxu0 0.0
      %837 = vmatpush1.xpose.msra.mxu0 0.0
      %838 = vmatprep.subr.mxu0 0.0
      %839 = vmatpush1.xpose.msra.mxu0 0.0
      %840 = vmatprep.subr.mxu0 0.0
      %841 = vmatpush1.xpose.msra.mxu0 0.0
      %842 = vmatprep.subr.mxu0 0.0
      %843 = vmatpush1.xpose.msra.mxu0 0.0
      %844 = vmatprep.subr.mxu0 0.0
      %845 = vmatpush1.xpose.msra.mxu0 0.0
      %846 = vmatprep.subr.mxu0 0.0
      %847 = vmatpush1.xpose.msra.mxu0 0.0
      %848 = vmatprep.subr.mxu0 0.0
      %849 = vmatpush1.xpose.msra.mxu0 0.0
      %850 = vmatprep.subr.mxu0 0.0
      %851 = vmatpush1.xpose.msra.mxu0 0.0
      %852 = vmatprep.subr.mxu0 0.0
      %853 = vmatpush1.xpose.msra.mxu0 0.0
      %854 = vmatprep.subr.mxu0 0.0
      %855 = vmatpush1.xpose.msra.mxu0 0.0
      %856 = vmatprep.subr.mxu0 0.0
      %857 = vmatpush1.xpose.msra.mxu0 0.0
      %858 = vmatprep.subr.mxu0 0.0
      %859 = vmatpush1.xpose.msra.mxu0 0.0
      %860 = vmatprep.mubr.f32.mxu0 0.0
      %861 = vmatmul.mubr.f32.gmra.mrb[0].mxu0 %v786
      %v862 = vpop.f32.mrb[0].mxu0
      %v863 = vadd.f32 0.0, %v862
      %v864 = vpop.f32.mrb[0].mxu0
      %865 = vdwg.mxu0
      %v866 = vmul.f32 %v863, 0.35355338
      %v867 = vld [vmem:[%s2] sm:$0xff]
      %v868 = vadd.f32 %v866, %v867
      %v869 = vsel %vm659, %v868, -inf
      %870 = vmax.xlane.f32.xlu0 %v869
      %v871 = vpop.xlane.xlu0 %870
      %v872 = vsub.f32 %v868, %v871
      %v873 = vmul.f32 %v872, 1.442695
      %v874 = vpow.pop %v873
      %v875 = vld [vmem:[%s4] sm:$0xff]
      %v876 = vld [vmem:[%s4 + $0x8] sm:$0xff]
      %v877 = vld [vmem:[%s4 + $0x10] sm:$0xff]
      %v878 = vld [vmem:[%s4 + $0x18] sm:$0xff]
      %v880 = vsel %vm659, %v874, 0
      %882 = vmatprep.subr.mxu0 0.0
      %883 = vmatpush1.msra.mxu0 %v875
      %884 = vmatprep.subr.mxu0 0.0
      %885 = vmatpush1.msra.mxu0 %v876
      %886 = vmatprep.subr.mxu0 0.0
      %887 = vmatpush1.msra.mxu0 %v877
      %888 = vmatprep.subr.mxu0 0.0
      %889 = vmatpush1.msra.mxu0 %v878
      %890 = vmatprep.subr.mxu0 0.0
      %891 = vmatpush1.msra.mxu0 0.0
      %892 = vmatprep.subr.mxu0 0.0
      %893 = vmatpush1.msra.mxu0 0.0
      %894 = vmatprep.subr.mxu0 0.0
      %895 = vmatpush1.msra.mxu0 0.0
      %896 = vmatprep.subr.mxu0 0.0
      %897 = vmatpush1.msra.mxu0 0.0
      %898 = vmatprep.subr.mxu0 0.0
      %899 = vmatpush1.msra.mxu0 0.0
      %900 = vmatprep.subr.mxu0 0.0
      %901 = vmatpush1.msra.mxu0 0.0
      %902 = vmatprep.subr.mxu0 0.0
      %903 = vmatpush1.msra.mxu0 0.0
      %904 = vmatprep.subr.mxu0 0.0
      %905 = vmatpush1.msra.mxu0 0.0
      %906 = vmatprep.subr.mxu0 0.0
      %907 = vmatpush1.msra.mxu0 0.0
      %908 = vmatprep.subr.mxu0 0.0
      %909 = vmatpush1.msra.mxu0 0.0
      %910 = vmatprep.subr.mxu0 0.0
      %911 = vmatpush1.msra.mxu0 0.0
      %912 = vmatprep.subr.mxu0 0.0
      %913 = vmatpush1.msra.mxu0 0.0
      %914 = vmatprep.subr.mxu0 0.0
      %915 = vmatpush1.msra.mxu0 0.0
      %916 = vmatprep.subr.mxu0 0.0
      %917 = vmatpush1.msra.mxu0 0.0
      %918 = vmatprep.subr.mxu0 0.0
      %919 = vmatpush1.msra.mxu0 0.0
      %920 = vmatprep.subr.mxu0 0.0
      %921 = vmatpush1.msra.mxu0 0.0
      %922 = vmatprep.subr.mxu0 0.0
      %923 = vmatpush1.msra.mxu0 0.0
      %924 = vmatprep.subr.mxu0 0.0
      %925 = vmatpush1.msra.mxu0 0.0
      %926 = vmatprep.subr.mxu0 0.0
      %927 = vmatpush1.msra.mxu0 0.0
      %928 = vmatprep.subr.mxu0 0.0
      %929 = vmatpush1.msra.mxu0 0.0
      %930 = vmatprep.subr.mxu0 0.0
      %931 = vmatpush1.msra.mxu0 0.0
      %932 = vmatprep.subr.mxu0 0.0
      %933 = vmatpush1.msra.mxu0 0.0
      %934 = vmatprep.subr.mxu0 0.0
      %935 = vmatpush1.msra.mxu0 0.0
      %936 = vmatprep.subr.mxu0 0.0
      %937 = vmatpush1.msra.mxu0 0.0
      %938 = vmatprep.subr.mxu0 0.0
      %939 = vmatpush1.msra.mxu0 0.0
      %940 = vmatprep.subr.mxu0 0.0
      %941 = vmatpush1.msra.mxu0 0.0
      %942 = vmatprep.subr.mxu0 0.0
      %943 = vmatpush1.msra.mxu0 0.0
      %944 = vmatprep.subr.mxu0 0.0
      %945 = vmatpush1.msra.mxu0 0.0
      %946 = vmatprep.mubr.f32.mxu0 0.0
      %947 = vmatmul.mubr.f32.gmra.mrb[0].mxu0 %v880
      %v948 = vpop.f32.mrb[0].mxu0
      %v949 = vadd.f32 0.0, %v948
      %v950 = vpop.f32.mrb[0].mxu0
      %951 = vdwg.mxu0
      %v952 = vrcp.pop %v949
      %v953 = vmul.f32 %v874, %v952
      %958 = vrot.lane.b32.xlu0 %v769, 64
      %v959 = vpop.permute.xlu0 %958
      %960 = vrot.lane.b32.xlu0 %v770, 64
      %v961 = vpop.permute.xlu0 %960
      %962 = vrot.lane.b32.xlu0 %v771, 64
      %v963 = vpop.permute.xlu0 %962
      %964 = vrot.lane.b32.xlu0 %v772, 64
      %v965 = vpop.permute.xlu0 %964
      %v971 = vsel %vm659, %v953, 0
      %973 = vmatprep.subr.mxu0 0.0
      %974 = vmatpush1.msra.mxu0 %v959
      %975 = vmatprep.subr.mxu0 0.0
      %976 = vmatpush1.msra.mxu0 %v961
      %977 = vmatprep.subr.mxu0 0.0
      %978 = vmatpush1.msra.mxu0 %v963
      %979 = vmatprep.subr.mxu0 0.0
      %980 = vmatpush1.msra.mxu0 %v965
      %981 = vmatprep.subr.mxu0 0.0
      %982 = vmatpush1.msra.mxu0 0.0
      %983 = vmatprep.subr.mxu0 0.0
      %984 = vmatpush1.msra.mxu0 0.0
      %985 = vmatprep.subr.mxu0 0.0
      %986 = vmatpush1.msra.mxu0 0.0
      %987 = vmatprep.subr.mxu0 0.0
      %988 = vmatpush1.msra.mxu0 0.0
      %989 = vmatprep.subr.mxu0 0.0
      %990 = vmatpush1.msra.mxu0 0.0
      %991 = vmatprep.subr.mxu0 0.0
      %992 = vmatpush1.msra.mxu0 0.0
      %993 = vmatprep.subr.mxu0 0.0
      %994 = vmatpush1.msra.mxu0 0.0
      %995 = vmatprep.subr.mxu0 0.0
      %996 = vmatpush1.msra.mxu0 0.0
      %997 = vmatprep.subr.mxu0 0.0
      %998 = vmatpush1.msra.mxu0 0.0
      %999 = vmatprep.subr.mxu0 0.0
      %1000 = vmatpush1.msra.mxu0 0.0
      %1001 = vmatprep.subr.mxu0 0.0
      %1002 = vmatpush1.msra.mxu0 0.0
      %1003 = vmatprep.subr.mxu0 0.0
      %1004 = vmatpush1.msra.mxu0 0.0
      %1005 = vmatprep.subr.mxu0 0.0
      %1006 = vmatpush1.msra.mxu0 0.0
      %1007 = vmatprep.subr.mxu0 0.0
      %1008 = vmatpush1.msra.mxu0 0.0
      %1009 = vmatprep.subr.mxu0 0.0
      %1010 = vmatpush1.msra.mxu0 0.0
      %1011 = vmatprep.subr.mxu0 0.0
      %1012 = vmatpush1.msra.mxu0 0.0
      %1013 = vmatprep.subr.mxu0 0.0
      %1014 = vmatpush1.msra.mxu0 0.0
      %1015 = vmatprep.subr.mxu0 0.0
      %1016 = vmatpush1.msra.mxu0 0.0
      %1017 = vmatprep.subr.mxu0 0.0
      %1018 = vmatpush1.msra.mxu0 0.0
      %1019 = vmatprep.subr.mxu0 0.0
      %1020 = vmatpush1.msra.mxu0 0.0
      %1021 = vmatprep.subr.mxu0 0.0
      %1022 = vmatpush1.msra.mxu0 0.0
      %1023 = vmatprep.subr.mxu0 0.0
      %1024 = vmatpush1.msra.mxu0 0.0
      %1025 = vmatprep.subr.mxu0 0.0
      %1026 = vmatpush1.msra.mxu0 0.0
      %1027 = vmatprep.subr.mxu0 0.0
      %1028 = vmatpush1.msra.mxu0 0.0
      %1029 = vmatprep.subr.mxu0 0.0
      %1030 = vmatpush1.msra.mxu0 0.0
      %1031 = vmatprep.subr.mxu0 0.0
      %1032 = vmatpush1.msra.mxu0 0.0
      %1033 = vmatprep.subr.mxu0 0.0
      %1034 = vmatpush1.msra.mxu0 0.0
      %1035 = vmatprep.subr.mxu0 0.0
      %1036 = vmatpush1.msra.mxu0 0.0
      %1037 = vmatprep.mubr.f32.mxu0 0.0
      %1038 = vmatmul.mubr.f32.gmra.mrb[0].mxu0 %v971
      %v1039 = vpop.f32.mrb[0].mxu0
      %v1040 = vadd.f32 0.0, %v1039
      %v1041 = vpop.f32.mrb[0].mxu0
      %1042 = vdwg.mxu0
      %v1043 = vld [vmem:[%s10] sm:$0xff]
      %v1044 = vld [vmem:[%s10 + $0x8] sm:$0xff]
      %v1045 = vld [vmem:[%s10 + $0x10] sm:$0xff]
      %v1046 = vld [vmem:[%s10 + $0x18] sm:$0xff]
      %v1047 = vld [vmem:[%s11] sm:$0x1]
      %v1049 = vlaneseq
      %v1050 = vshrl.u32 %v1049, 7
      %v1051 = vsub.s32 0, %v1050
      %v1052 = vrot.slane %v1047, %v1051
      %v1055 = vsel %vm659, %v1040, 0
      %1057 = vmatprep.subr.mxu0 0.0
      %1058 = vmatpush1.msra.mxu0 %v1043
      %1059 = vmatprep.subr.mxu0 0.0
      %1060 = vmatpush1.msra.mxu0 %v1044
      %1061 = vmatprep.subr.mxu0 0.0
      %1062 = vmatpush1.msra.mxu0 %v1045
      %1063 = vmatprep.subr.mxu0 0.0
      %1064 = vmatpush1.msra.mxu0 %v1046
      %1065 = vmatprep.subr.mxu0 0.0
      %1066 = vmatpush1.msra.mxu0 0.0
      %1067 = vmatprep.subr.mxu0 0.0
      %1068 = vmatpush1.msra.mxu0 0.0
      %1069 = vmatprep.subr.mxu0 0.0
      %1070 = vmatpush1.msra.mxu0 0.0
      %1071 = vmatprep.subr.mxu0 0.0
      %1072 = vmatpush1.msra.mxu0 0.0
      %1073 = vmatprep.subr.mxu0 0.0
      %1074 = vmatpush1.msra.mxu0 0.0
      %1075 = vmatprep.subr.mxu0 0.0
      %1076 = vmatpush1.msra.mxu0 0.0
      %1077 = vmatprep.subr.mxu0 0.0
      %1078 = vmatpush1.msra.mxu0 0.0
      %1079 = vmatprep.subr.mxu0 0.0
      %1080 = vmatpush1.msra.mxu0 0.0
      %1081 = vmatprep.subr.mxu0 0.0
      %1082 = vmatpush1.msra.mxu0 0.0
      %1083 = vmatprep.subr.mxu0 0.0
      %1084 = vmatpush1.msra.mxu0 0.0
      %1085 = vmatprep.subr.mxu0 0.0
      %1086 = vmatpush1.msra.mxu0 0.0
      %1087 = vmatprep.subr.mxu0 0.0
      %1088 = vmatpush1.msra.mxu0 0.0
      %1089 = vmatprep.subr.mxu0 0.0
      %1090 = vmatpush1.msra.mxu0 0.0
      %1091 = vmatprep.subr.mxu0 0.0
      %1092 = vmatpush1.msra.mxu0 0.0
      %1093 = vmatprep.subr.mxu0 0.0
      %1094 = vmatpush1.msra.mxu0 0.0
      %1095 = vmatprep.subr.mxu0 0.0
      %1096 = vmatpush1.msra.mxu0 0.0
      %1097 = vmatprep.subr.mxu0 0.0
      %1098 = vmatpush1.msra.mxu0 0.0
      %1099 = vmatprep.subr.mxu0 0.0
      %1100 = vmatpush1.msra.mxu0 0.0
      %1101 = vmatprep.subr.mxu0 0.0
      %1102 = vmatpush1.msra.mxu0 0.0
      %1103 = vmatprep.subr.mxu0 0.0
      %1104 = vmatpush1.msra.mxu0 0.0
      %1105 = vmatprep.subr.mxu0 0.0
      %1106 = vmatpush1.msra.mxu0 0.0
      %1107 = vmatprep.subr.mxu0 0.0
      %1108 = vmatpush1.msra.mxu0 0.0
      %1109 = vmatprep.subr.mxu0 0.0
      %1110 = vmatpush1.msra.mxu0 0.0
      %1111 = vmatprep.subr.mxu0 0.0
      %1112 = vmatpush1.msra.mxu0 0.0
      %1113 = vmatprep.subr.mxu0 0.0
      %1114 = vmatpush1.msra.mxu0 0.0
      %1115 = vmatprep.subr.mxu0 0.0
      %1116 = vmatpush1.msra.mxu0 0.0
      %1117 = vmatprep.subr.mxu0 0.0
      %1118 = vmatpush1.msra.mxu0 0.0
      %1119 = vmatprep.subr.mxu0 0.0
      %1120 = vmatpush1.msra.mxu0 0.0
      %1121 = vmatprep.mubr.f32.mxu0 0.0
      %1122 = vmatmul.mubr.f32.gmra.mrb[0].mxu0 %v1055
      %v1123 = vpop.f32.mrb[0].mxu0
      %v1124 = vadd.f32 %v1052, %v1123
      %v1125 = vpop.f32.mrb[0].mxu0
      %1126 = vdwg.mxu0
      %v1127 = vsel %vm659, %v1124, 0.0
      %1128 = vadd.xlane.f32.xlu0 %v1127
      %v1129 = vpop.xlane.xlu0 %1128
      %v1130 = vrcp.pop 32.0
      %v1131 = vmul.f32 %v1129, %v1130
      %v1132 = vsub.f32 %v1124, %v1131
      %v1133 = vmul.f32 %v1132, %v1132
      %v1134 = vsel %vm659, %v1133, 0.0
      %1135 = vadd.xlane.f32.xlu0 %v1134
      %v1136 = vpop.xlane.xlu0 %1135
      %v1137 = vmul.f32 %v1136, %v1130
      %v1138 = vadd.f32 %v1137, 1e-05
      %v1139 = vrsqrt.pop %v1138
      %v1140 = vmul.f32 %v1132, %v1139
      %v1141 = vld [vmem:[%s12] sm:$0x1]
      %v1143 = vlaneseq
      %v1144 = vshrl.u32 %v1143, 7
      %v1145 = vsub.s32 0, %v1144
      %v1146 = vrot.slane %v1141, %v1145
      %v1148 = vmul.f32 %v1140, %v1146
      %v1149 = vld [vmem:[%s13] sm:$0x1]
      %v1151 = vlaneseq
      %v1152 = vshrl.u32 %v1151, 7
      %v1153 = vsub.s32 0, %v1152
      %v1154 = vrot.slane %v1149, %v1153
      %v1156 = vadd.f32 %v1148, %v1154
      %1158 = vrot.lane.b32.xlu0 %v1156, 120
      %v1159 = vpop.permute.xlu0 %1158
      %1160 = vrot.lane.b32.xlu0 %v1156, 112
      %v1161 = vpop.permute.xlu0 %1160
      %1162 = vrot.lane.b32.xlu0 %v1156, 104
      %v1163 = vpop.permute.xlu0 %1162
      %v1164 = vld [vmem:[%s14] sm:$0xff]
      %v1165 = vld [vmem:[%s15] sm:$0x1]
      %v1167 = vlaneseq
      %v1168 = vshrl.u32 %v1167, 7
      %v1169 = vsub.s32 0, %v1168
      %v1170 = vrot.slane %v1165, %v1169
      %vm1172 = vcmask 64512
      %v1173 = vsel %vm1172, %v1156, 0
      %v1175 = vsel %vm1172, %v1159, 0
      %v1177 = vsel %vm1172, %v1161, 0
      %v1179 = vsel %vm1172, %v1163, 0
      %1181 = vmatprep.subr.mxu0 0.0
      %1182 = vmatpush1.msra.mxu0 %v1164
      %1183 = vmatprep.subr.mxu0 0.0
      %1184 = vmatpush1.msra.mxu0 0.0
      %1185 = vmatprep.subr.mxu0 0.0
      %1186 = vmatpush1.msra.mxu0 0.0
      %1187 = vmatprep.subr.mxu0 0.0
      %1188 = vmatpush1.msra.mxu0 0.0
      %1189 = vmatprep.subr.mxu0 0.0
      %1190 = vmatpush1.msra.mxu0 0.0
      %1191 = vmatprep.subr.mxu0 0.0
      %1192 = vmatpush1.msra.mxu0 0.0
      %1193 = vmatprep.subr.mxu0 0.0
      %1194 = vmatpush1.msra.mxu0 0.0
      %1195 = vmatprep.subr.mxu0 0.0
      %1196 = vmatpush1.msra.mxu0 0.0
      %1197 = vmatprep.subr.mxu0 0.0
      %1198 = vmatpush1.msra.mxu0 0.0
      %1199 = vmatprep.subr.mxu0 0.0
      %1200 = vmatpush1.msra.mxu0 0.0
      %1201 = vmatprep.subr.mxu0 0.0
      %1202 = vmatpush1.msra.mxu0 0.0
      %1203 = vmatprep.subr.mxu0 0.0
      %1204 = vmatpush1.msra.mxu0 0.0
      %1205 = vmatprep.subr.mxu0 0.0
      %1206 = vmatpush1.msra.mxu0 0.0
      %1207 = vmatprep.subr.mxu0 0.0
      %1208 = vmatpush1.msra.mxu0 0.0
      %1209 = vmatprep.subr.mxu0 0.0
      %1210 = vmatpush1.msra.mxu0 0.0
      %1211 = vmatprep.subr.mxu0 0.0
      %1212 = vmatpush1.msra.mxu0 0.0
      %1213 = vmatprep.subr.mxu0 0.0
      %1214 = vmatpush1.msra.mxu0 0.0
      %1215 = vmatprep.subr.mxu0 0.0
      %1216 = vmatpush1.msra.mxu0 0.0
      %1217 = vmatprep.subr.mxu0 0.0
      %1218 = vmatpush1.msra.mxu0 0.0
      %1219 = vmatprep.subr.mxu0 0.0
      %1220 = vmatpush1.msra.mxu0 0.0
      %1221 = vmatprep.subr.mxu0 0.0
      %1222 = vmatpush1.msra.mxu0 0.0
      %1223 = vmatprep.subr.mxu0 0.0
      %1224 = vmatpush1.msra.mxu0 0.0
      %1225 = vmatprep.subr.mxu0 0.0
      %1226 = vmatpush1.msra.mxu0 0.0
      %1227 = vmatprep.subr.mxu0 0.0
      %1228 = vmatpush1.msra.mxu0 0.0
      %1229 = vmatprep.subr.mxu0 0.0
      %1230 = vmatpush1.msra.mxu0 0.0
      %1231 = vmatprep.subr.mxu0 0.0
      %1232 = vmatpush1.msra.mxu0 0.0
      %1233 = vmatprep.subr.mxu0 0.0
      %1234 = vmatpush1.msra.mxu0 0.0
      %1235 = vmatprep.subr.mxu0 0.0
      %1236 = vmatpush1.msra.mxu0 0.0
      %1237 = vmatprep.subr.mxu0 0.0
      %1238 = vmatpush1.msra.mxu0 0.0
      %1239 = vmatprep.subr.mxu0 0.0
      %1240 = vmatpush1.msra.mxu0 0.0
      %1241 = vmatprep.subr.mxu0 0.0
      %1242 = vmatpush1.msra.mxu0 0.0
      %1243 = vmatprep.subr.mxu0 0.0
      %1244 = vmatpush1.msra.mxu0 0.0
      %1245 = vmatprep.mubr.f32.mxu0 0.0
      %1246 = vmatmul.mubr.f32.gmra.mrb[0].mxu0 %v1173
      %v1247 = vpop.f32.mrb[0].mxu0
      %v1248 = vadd.f32 %v1170, %v1247
      %v1249 = vpop.f32.mrb[0].mxu0
      %1250 = vmatprep.mubr.f32.mxu0 0.0
      %1251 = vmatmul.mubr.f32.gmra.mrb[0].mxu0 %v1175
      %v1252 = vpop.f32.mrb[0].mxu0
      %v1253 = vadd.f32 %v1170, %v1252
      %v1254 = vpop.f32.mrb[0].mxu0
      %1255 = vmatprep.mubr.f32.mxu0 0.0
      %1256 = vmatmul.mubr.f32.gmra.mrb[0].mxu0 %v1177
      %v1257 = vpop.f32.mrb[0].mxu0
      %v1258 = vadd.f32 %v1170, %v1257
      %v1259 = vpop.f32.mrb[0].mxu0
      %1260 = vmatprep.mubr.f32.mxu0 0.0
      %1261 = vmatmul.mubr.f32.gmra.mrb[0].mxu0 %v1179
      %v1262 = vpop.f32.mrb[0].mxu0
      %v1263 = vadd.f32 %v1170, %v1262
      %v1264 = vpop.f32.mrb[0].mxu0
      %1265 = vdwg.mxu0
      %v1266 = vld [vmem:[%s641] sm:$0xff]
      %v1267 = vld [vmem:[%s641 + $0x8] sm:$0xff]
      %v1268 = vld [vmem:[%s641 + $0x10] sm:$0xff]
      %v1269 = vld [vmem:[%s641 + $0x18] sm:$0xff]
      %v1270 = vld [vmem:[%s641 + $0x20] sm:$0xff]
      %v1271 = vld [vmem:[%s641 + $0x28] sm:$0xff]
      %v1272 = vld [vmem:[%s16] sm:$0xff]
      %v1273 = vld [vmem:[%s17] sm:$0x1]
      %v1275 = vlaneseq
      %v1276 = vshrl.u32 %v1275, 7
      %v1277 = vsub.s32 0, %v1276
      %v1278 = vrot.slane %v1273, %v1277
      %v1281 = vsel %vm1172, %v1266, 0
      %v1284 = vsel %vm1172, %v1267, 0
      %v1287 = vsel %vm1172, %v1268, 0
      %v1290 = vsel %vm1172, %v1269, 0
      %v1293 = vsel %vm1172, %v1270, 0
      %v1296 = vsel %vm1172, %v1271, 0
      %1298 = vmatprep.subr.mxu0 0.0
      %1299 = vmatpush1.msra.mxu0 %v1272
      %1300 = vmatprep.subr.mxu0 0.0
      %1301 = vmatpush1.msra.mxu0 0.0
      %1302 = vmatprep.subr.mxu0 0.0
      %1303 = vmatpush1.msra.mxu0 0.0
      %1304 = vmatprep.subr.mxu0 0.0
      %1305 = vmatpush1.msra.mxu0 0.0
      %1306 = vmatprep.subr.mxu0 0.0
      %1307 = vmatpush1.msra.mxu0 0.0
      %1308 = vmatprep.subr.mxu0 0.0
      %1309 = vmatpush1.msra.mxu0 0.0
      %1310 = vmatprep.subr.mxu0 0.0
      %1311 = vmatpush1.msra.mxu0 0.0
      %1312 = vmatprep.subr.mxu0 0.0
      %1313 = vmatpush1.msra.mxu0 0.0
      %1314 = vmatprep.subr.mxu0 0.0
      %1315 = vmatpush1.msra.mxu0 0.0
      %1316 = vmatprep.subr.mxu0 0.0
      %1317 = vmatpush1.msra.mxu0 0.0
      %1318 = vmatprep.subr.mxu0 0.0
      %1319 = vmatpush1.msra.mxu0 0.0
      %1320 = vmatprep.subr.mxu0 0.0
      %1321 = vmatpush1.msra.mxu0 0.0
      %1322 = vmatprep.subr.mxu0 0.0
      %1323 = vmatpush1.msra.mxu0 0.0
      %1324 = vmatprep.subr.mxu0 0.0
      %1325 = vmatpush1.msra.mxu0 0.0
      %1326 = vmatprep.subr.mxu0 0.0
      %1327 = vmatpush1.msra.mxu0 0.0
      %1328 = vmatprep.subr.mxu0 0.0
      %1329 = vmatpush1.msra.mxu0 0.0
      %1330 = vmatprep.subr.mxu0 0.0
      %1331 = vmatpush1.msra.mxu0 0.0
      %1332 = vmatprep.subr.mxu0 0.0
      %1333 = vmatpush1.msra.mxu0 0.0
      %1334 = vmatprep.subr.mxu0 0.0
      %1335 = vmatpush1.msra.mxu0 0.0
      %1336 = vmatprep.subr.mxu0 0.0
      %1337 = vmatpush1.msra.mxu0 0.0
      %1338 = vmatprep.subr.mxu0 0.0
      %1339 = vmatpush1.msra.mxu0 0.0
      %1340 = vmatprep.subr.mxu0 0.0
      %1341 = vmatpush1.msra.mxu0 0.0
      %1342 = vmatprep.subr.mxu0 0.0
      %1343 = vmatpush1.msra.mxu0 0.0
      %1344 = vmatprep.subr.mxu0 0.0
      %1345 = vmatpush1.msra.mxu0 0.0
      %1346 = vmatprep.subr.mxu0 0.0
      %1347 = vmatpush1.msra.mxu0 0.0
      %1348 = vmatprep.subr.mxu0 0.0
      %1349 = vmatpush1.msra.mxu0 0.0
      %1350 = vmatprep.subr.mxu0 0.0
      %1351 = vmatpush1.msra.mxu0 0.0
      %1352 = vmatprep.subr.mxu0 0.0
      %1353 = vmatpush1.msra.mxu0 0.0
      %1354 = vmatprep.subr.mxu0 0.0
      %1355 = vmatpush1.msra.mxu0 0.0
      %1356 = vmatprep.subr.mxu0 0.0
      %1357 = vmatpush1.msra.mxu0 0.0
      %1358 = vmatprep.subr.mxu0 0.0
      %1359 = vmatpush1.msra.mxu0 0.0
      %1360 = vmatprep.subr.mxu0 0.0
      %1361 = vmatpush1.msra.mxu0 0.0
      %1362 = vmatprep.mubr.f32.mxu0 0.0
      %1363 = vmatmul.mubr.f32.gmra.mrb[0].mxu0 %v1281
      %v1364 = vpop.f32.mrb[0].mxu0
      %v1365 = vadd.f32 %v1278, %v1364
      %v1366 = vpop.f32.mrb[0].mxu0
      %1367 = vmatprep.mubr.f32.mxu0 0.0
      %1368 = vmatmul.mubr.f32.gmra.mrb[0].mxu0 %v1284
      %v1369 = vpop.f32.mrb[0].mxu0
      %v1370 = vadd.f32 %v1278, %v1369
      %v1371 = vpop.f32.mrb[0].mxu0
      %1372 = vmatprep.mubr.f32.mxu0 0.0
      %1373 = vmatmul.mubr.f32.gmra.mrb[0].mxu0 %v1287
      %v1374 = vpop.f32.mrb[0].mxu0
      %v1375 = vadd.f32 %v1278, %v1374
      %v1376 = vpop.f32.mrb[0].mxu0
      %1377 = vmatprep.mubr.f32.mxu0 0.0
      %1378 = vmatmul.mubr.f32.gmra.mrb[0].mxu0 %v1290
      %v1379 = vpop.f32.mrb[0].mxu0
      %v1380 = vadd.f32 %v1278, %v1379
      %v1381 = vpop.f32.mrb[0].mxu0
      %1382 = vmatprep.mubr.f32.mxu0 0.0
      %1383 = vmatmul.mubr.f32.gmra.mrb[0].mxu0 %v1293
      %v1384 = vpop.f32.mrb[0].mxu0
      %v1385 = vadd.f32 %v1278, %v1384
      %v1386 = vpop.f32.mrb[0].mxu0
      %1387 = vmatprep.mubr.f32.mxu0 0.0
      %1388 = vmatmul.mubr.f32.gmra.mrb[0].mxu0 %v1296
      %v1389 = vpop.f32.mrb[0].mxu0
      %v1390 = vadd.f32 %v1278, %v1389
      %v1391 = vpop.f32.mrb[0].mxu0
      %1392 = vdwg.mxu0
      %v1393 = vld [vmem:[%s6] sm:$0xff]
      %v1394 = vld [vmem:[%s6 + $0x8] sm:$0xff]
      %v1395 = vld [vmem:[%s6 + $0x10] sm:$0xff]
      %v1396 = vld [vmem:[%s6 + $0x18] sm:$0xff]
      %v1397 = vld [vmem:[%s6 + $0x20] sm:$0xff]
      %v1398 = vld [vmem:[%s6 + $0x28] sm:$0xff]
      %v1399 = vld [vmem:[%s6 + $0x30] sm:$0xff]
      %v1400 = vld [vmem:[%s6 + $0x38] sm:$0xff]
      %v1401 = vld [vmem:[%s6 + $0x40] sm:$0xff]
      %v1402 = vld [vmem:[%s6 + $0x48] sm:$0xff]
      %v1403 = vld [vmem:[%s6 + $0x50] sm:$0xff]
      %v1404 = vld [vmem:[%s6 + $0x58] sm:$0xff]
      %v1405 = vmul.f32 %v1365, %v1393
      %v1406 = vmul.f32 %v1370, %v1394
      %v1407 = vmul.f32 %v1375, %v1395
      %v1408 = vmul.f32 %v1380, %v1396
      %v1409 = vmul.f32 %v1385, %v1397
      %v1410 = vmul.f32 %v1390, %v1398
      %v1411 = vmul.f32 %v1365, %v1399
      %v1412 = vmul.f32 %v1370, %v1400
      %v1413 = vmul.f32 %v1375, %v1401
      %v1414 = vmul.f32 %v1380, %v1402
      %v1415 = vmul.f32 %v1385, %v1403
      %v1416 = vmul.f32 %v1390, %v1404
      %1429 = vrot.lane.b32.xlu0 %v1393, 16
      %v1430 = vpop.permute.xlu0 %1429
      %1431 = vrot.lane.b32.xlu0 %v1394, 16
      %v1432 = vpop.permute.xlu0 %1431
      %1433 = vrot.lane.b32.xlu0 %v1395, 16
      %v1434 = vpop.permute.xlu0 %1433
      %1435 = vrot.lane.b32.xlu0 %v1396, 16
      %v1436 = vpop.permute.xlu0 %1435
      %1437 = vrot.lane.b32.xlu0 %v1397, 16
      %v1438 = vpop.permute.xlu0 %1437
      %1439 = vrot.lane.b32.xlu0 %v1398, 16
      %v1440 = vpop.permute.xlu0 %1439
      %1441 = vrot.lane.b32.xlu0 %v1399, 16
      %v1442 = vpop.permute.xlu0 %1441
      %1443 = vrot.lane.b32.xlu0 %v1400, 16
      %v1444 = vpop.permute.xlu0 %1443
      %1445 = vrot.lane.b32.xlu0 %v1401, 16
      %v1446 = vpop.permute.xlu0 %1445
      %1447 = vrot.lane.b32.xlu0 %v1402, 16
      %v1448 = vpop.permute.xlu0 %1447
      %1449 = vrot.lane.b32.xlu0 %v1403, 16
      %v1450 = vpop.permute.xlu0 %1449
      %1451 = vrot.lane.b32.xlu0 %v1404, 16
      %v1452 = vpop.permute.xlu0 %1451
      %v1465 = vmul.f32 %v1365, %v1430
      %v1466 = vmul.f32 %v1370, %v1432
      %v1467 = vmul.f32 %v1375, %v1434
      %v1468 = vmul.f32 %v1380, %v1436
      %v1469 = vmul.f32 %v1385, %v1438
      %v1470 = vmul.f32 %v1390, %v1440
      %v1471 = vmul.f32 %v1365, %v1442
      %v1472 = vmul.f32 %v1370, %v1444
      %v1473 = vmul.f32 %v1375, %v1446
      %v1474 = vmul.f32 %v1380, %v1448
      %v1475 = vmul.f32 %v1385, %v1450
      %v1476 = vmul.f32 %v1390, %v1452
      %vm1477 = vcmask 130048
      %v1479 = vsel %vm1477, %v1248, 0
      %v1482 = vsel %vm1477, %v1253, 0
      %v1485 = vsel %vm1477, %v1258, 0
      %v1488 = vsel %vm1477, %v1263, 0
      %v1491 = vsel %vm1477, %v1405, 0
      %v1494 = vsel %vm1477, %v1406, 0
      %v1497 = vsel %vm1477, %v1407, 0
      %v1500 = vsel %vm1477, %v1408, 0
      %v1503 = vsel %vm1477, %v1409, 0
      %v1506 = vsel %vm1477, %v1410, 0
      %v1509 = vsel %vm1477, %v1411, 0
      %v1512 = vsel %vm1477, %v1412, 0
      %v1515 = vsel %vm1477, %v1413, 0
      %v1518 = vsel %vm1477, %v1414, 0
      %v1521 = vsel %vm1477, %v1415, 0
      %v1524 = vsel %vm1477, %v1416, 0
      %1526 = vmatprep.subr.mxu0 0.0
      %1527 = vmatpush1.xpose.msra.mxu0 %v1491
      %1528 = vmatprep.subr.mxu0 0.0
      %1529 = vmatpush1.xpose.msra.mxu0 %v1494
      %1530 = vmatprep.subr.mxu0 0.0
      %1531 = vmatpush1.xpose.msra.mxu0 %v1497
      %1532 = vmatprep.subr.mxu0 0.0
      %1533 = vmatpush1.xpose.msra.mxu0 %v1500
      %1534 = vmatprep.subr.mxu0 0.0
      %1535 = vmatpush1.xpose.msra.mxu0 %v1503
      %1536 = vmatprep.subr.mxu0 0.0
      %1537 = vmatpush1.xpose.msra.mxu0 %v1506
      %1538 = vmatprep.subr.mxu0 0.0
      %1539 = vmatpush1.xpose.msra.mxu0 %v1509
      %1540 = vmatprep.subr.mxu0 0.0
      %1541 = vmatpush1.xpose.msra.mxu0 %v1512
      %1542 = vmatprep.subr.mxu0 0.0
      %1543 = vmatpush1.xpose.msra.mxu0 %v1515
      %1544 = vmatprep.subr.mxu0 0.0
      %1545 = vmatpush1.xpose.msra.mxu0 %v1518
      %1546 = vmatprep.subr.mxu0 0.0
      %1547 = vmatpush1.xpose.msra.mxu0 %v1521
      %1548 = vmatprep.subr.mxu0 0.0
      %1549 = vmatpush1.xpose.msra.mxu0 %v1524
      %1550 = vmatprep.subr.mxu0 0.0
      %1551 = vmatpush1.xpose.msra.mxu0 0.0
      %1552 = vmatprep.subr.mxu0 0.0
      %1553 = vmatpush1.xpose.msra.mxu0 0.0
      %1554 = vmatprep.subr.mxu0 0.0
      %1555 = vmatpush1.xpose.msra.mxu0 0.0
      %1556 = vmatprep.subr.mxu0 0.0
      %1557 = vmatpush1.xpose.msra.mxu0 0.0
      %1558 = vmatprep.subr.mxu0 0.0
      %1559 = vmatpush1.xpose.msra.mxu0 0.0
      %1560 = vmatprep.subr.mxu0 0.0
      %1561 = vmatpush1.xpose.msra.mxu0 0.0
      %1562 = vmatprep.subr.mxu0 0.0
      %1563 = vmatpush1.xpose.msra.mxu0 0.0
      %1564 = vmatprep.subr.mxu0 0.0
      %1565 = vmatpush1.xpose.msra.mxu0 0.0
      %1566 = vmatprep.subr.mxu0 0.0
      %1567 = vmatpush1.xpose.msra.mxu0 0.0
      %1568 = vmatprep.subr.mxu0 0.0
      %1569 = vmatpush1.xpose.msra.mxu0 0.0
      %1570 = vmatprep.subr.mxu0 0.0
      %1571 = vmatpush1.xpose.msra.mxu0 0.0
      %1572 = vmatprep.subr.mxu0 0.0
      %1573 = vmatpush1.xpose.msra.mxu0 0.0
      %1574 = vmatprep.subr.mxu0 0.0
      %1575 = vmatpush1.xpose.msra.mxu0 0.0
      %1576 = vmatprep.subr.mxu0 0.0
      %1577 = vmatpush1.xpose.msra.mxu0 0.0
      %1578 = vmatprep.subr.mxu0 0.0
      %1579 = vmatpush1.xpose.msra.mxu0 0.0
      %1580 = vmatprep.subr.mxu0 0.0
      %1581 = vmatpush1.xpose.msra.mxu0 0.0
      %1582 = vmatprep.subr.mxu0 0.0
      %1583 = vmatpush1.xpose.msra.mxu0 0.0
      %1584 = vmatprep.subr.mxu0 0.0
      %1585 = vmatpush1.xpose.msra.mxu0 0.0
      %1586 = vmatprep.subr.mxu0 0.0
      %1587 = vmatpush1.xpose.msra.mxu0 0.0
      %1588 = vmatprep.subr.mxu0 0.0
      %1589 = vmatpush1.xpose.msra.mxu0 0.0
      %1590 = vmatprep.mubr.f32.mxu0 0.0
      %1591 = vmatmul.mubr.f32.gmra.mrb[0].mxu0 %v1479
      %v1592 = vpop.f32.mrb[0].mxu0
      %v1593 = vadd.f32 0.0, %v1592
      %v1594 = vpop.f32.mrb[0].mxu0
      %1595 = vmatprep.mubr.f32.mxu0 0.0
      %1596 = vmatmul.mubr.f32.gmra.mrb[0].mxu0 %v1482
      %v1597 = vpop.f32.mrb[0].mxu0
      %v1598 = vadd.f32 0.0, %v1597
      %v1599 = vpop.f32.mrb[0].mxu0
      %1600 = vmatprep.mubr.f32.mxu0 0.0
      %1601 = vmatmul.mubr.f32.gmra.mrb[0].mxu0 %v1485
      %v1602 = vpop.f32.mrb[0].mxu0
      %v1603 = vadd.f32 0.0, %v1602
      %v1604 = vpop.f32.mrb[0].mxu0
      %1605 = vmatprep.mubr.f32.mxu0 0.0
      %1606 = vmatmul.mubr.f32.gmra.mrb[0].mxu0 %v1488
      %v1607 = vpop.f32.mrb[0].mxu0
      %v1608 = vadd.f32 0.0, %v1607
      %v1609 = vpop.f32.mrb[0].mxu0
      %1610 = vdwg.mxu0
      %v1611 = vmul.f32 %v1593, 0.35355338
      %v1612 = vmul.f32 %v1598, 0.35355338
      %v1613 = vmul.f32 %v1603, 0.35355338
      %v1614 = vmul.f32 %v1608, 0.35355338
      %v1615 = vld [vmem:[%s5] sm:$0xff]
      %v1616 = vld [vmem:[%s5 + $0x8] sm:$0xff]
      %v1617 = vld [vmem:[%s5 + $0x10] sm:$0xff]
      %v1618 = vld [vmem:[%s5 + $0x18] sm:$0xff]
      %v1619 = vadd.f32 %v1611, %v1615
      %v1620 = vadd.f32 %v1612, %v1616
      %v1621 = vadd.f32 %v1613, %v1617
      %v1622 = vadd.f32 %v1614, %v1618
      %vm1623 = vcmask 785408
      %v1624 = vsel %vm1623, %v1619, -inf
      %1625 = vmax.xlane.f32.xlu0 %v1624
      %v1626 = vpop.xlane.xlu0 %1625
      %v1627 = vsel %vm1623, %v1620, -inf
      %1628 = vmax.xlane.f32.xlu0 %v1627
      %v1629 = vpop.xlane.xlu0 %1628
      %v1630 = vsel %vm1623, %v1621, -inf
      %1631 = vmax.xlane.f32.xlu0 %v1630
      %v1632 = vpop.xlane.xlu0 %1631
      %v1633 = vsel %vm1623, %v1622, -inf
      %1634 = vmax.xlane.f32.xlu0 %v1633
      %v1635 = vpop.xlane.xlu0 %1634
      %v1636 = vsub.f32 %v1619, %v1626
      %v1637 = vsub.f32 %v1620, %v1629
      %v1638 = vsub.f32 %v1621, %v1632
      %v1639 = vsub.f32 %v1622, %v1635
      %v1640 = vmul.f32 %v1636, 1.442695
      %v1641 = vpow.pop %v1640
      %v1642 = vmul.f32 %v1637, 1.442695
      %v1643 = vpow.pop %v1642
      %v1644 = vmul.f32 %v1638, 1.442695
      %v1645 = vpow.pop %v1644
      %v1646 = vmul.f32 %v1639, 1.442695
      %v1647 = vpow.pop %v1646
      %v1648 = vld [vmem:[%s7] sm:$0xff]
      %v1649 = vld [vmem:[%s7 + $0x8] sm:$0xff]
      %v1650 = vld [vmem:[%s7 + $0x10] sm:$0xff]
      %v1651 = vld [vmem:[%s7 + $0x18] sm:$0xff]
      %v1652 = vld [vmem:[%s7 + $0x20] sm:$0xff]
      %v1653 = vld [vmem:[%s7 + $0x28] sm:$0xff]
      %v1654 = vld [vmem:[%s7 + $0x30] sm:$0xff]
      %v1655 = vld [vmem:[%s7 + $0x38] sm:$0xff]
      %v1656 = vld [vmem:[%s7 + $0x40] sm:$0xff]
      %v1657 = vld [vmem:[%s7 + $0x48] sm:$0xff]
      %v1658 = vld [vmem:[%s7 + $0x50] sm:$0xff]
      %v1659 = vld [vmem:[%s7 + $0x58] sm:$0xff]
      %v1661 = vsel %vm1623, %v1641, 0
      %v1664 = vsel %vm1623, %v1643, 0
      %v1667 = vsel %vm1623, %v1645, 0
      %v1670 = vsel %vm1623, %v1647, 0
      %1672 = vmatprep.subr.mxu0 0.0
      %1673 = vmatpush1.msra.mxu0 %v1648
      %1674 = vmatprep.subr.mxu0 0.0
      %1675 = vmatpush1.msra.mxu0 %v1649
      %1676 = vmatprep.subr.mxu0 0.0
      %1677 = vmatpush1.msra.mxu0 %v1650
      %1678 = vmatprep.subr.mxu0 0.0
      %1679 = vmatpush1.msra.mxu0 %v1651
      %1680 = vmatprep.subr.mxu0 0.0
      %1681 = vmatpush1.msra.mxu0 %v1652
      %1682 = vmatprep.subr.mxu0 0.0
      %1683 = vmatpush1.msra.mxu0 %v1653
      %1684 = vmatprep.subr.mxu0 0.0
      %1685 = vmatpush1.msra.mxu0 %v1654
      %1686 = vmatprep.subr.mxu0 0.0
      %1687 = vmatpush1.msra.mxu0 %v1655
      %1688 = vmatprep.subr.mxu0 0.0
      %1689 = vmatpush1.msra.mxu0 %v1656
      %1690 = vmatprep.subr.mxu0 0.0
      %1691 = vmatpush1.msra.mxu0 %v1657
      %1692 = vmatprep.subr.mxu0 0.0
      %1693 = vmatpush1.msra.mxu0 %v1658
      %1694 = vmatprep.subr.mxu0 0.0
      %1695 = vmatpush1.msra.mxu0 %v1659
      %1696 = vmatprep.subr.mxu0 0.0
      %1697 = vmatpush1.msra.mxu0 0.0
      %1698 = vmatprep.subr.mxu0 0.0
      %1699 = vmatpush1.msra.mxu0 0.0
      %1700 = vmatprep.subr.mxu0 0.0
      %1701 = vmatpush1.msra.mxu0 0.0
      %1702 = vmatprep.subr.mxu0 0.0
      %1703 = vmatpush1.msra.mxu0 0.0
      %1704 = vmatprep.subr.mxu0 0.0
      %1705 = vmatpush1.msra.mxu0 0.0
      %1706 = vmatprep.subr.mxu0 0.0
      %1707 = vmatpush1.msra.mxu0 0.0
      %1708 = vmatprep.subr.mxu0 0.0
      %1709 = vmatpush1.msra.mxu0 0.0
      %1710 = vmatprep.subr.mxu0 0.0
      %1711 = vmatpush1.msra.mxu0 0.0
      %1712 = vmatprep.subr.mxu0 0.0
      %1713 = vmatpush1.msra.mxu0 0.0
      %1714 = vmatprep.subr.mxu0 0.0
      %1715 = vmatpush1.msra.mxu0 0.0
      %1716 = vmatprep.subr.mxu0 0.0
      %1717 = vmatpush1.msra.mxu0 0.0
      %1718 = vmatprep.subr.mxu0 0.0
      %1719 = vmatpush1.msra.mxu0 0.0
      %1720 = vmatprep.subr.mxu0 0.0
      %1721 = vmatpush1.msra.mxu0 0.0
      %1722 = vmatprep.subr.mxu0 0.0
      %1723 = vmatpush1.msra.mxu0 0.0
      %1724 = vmatprep.subr.mxu0 0.0
      %1725 = vmatpush1.msra.mxu0 0.0
      %1726 = vmatprep.subr.mxu0 0.0
      %1727 = vmatpush1.msra.mxu0 0.0
      %1728 = vmatprep.subr.mxu0 0.0
      %1729 = vmatpush1.msra.mxu0 0.0
      %1730 = vmatprep.subr.mxu0 0.0
      %1731 = vmatpush1.msra.mxu0 0.0
      %1732 = vmatprep.subr.mxu0 0.0
      %1733 = vmatpush1.msra.mxu0 0.0
      %1734 = vmatprep.subr.mxu0 0.0
      %1735 = vmatpush1.msra.mxu0 0.0
      %1736 = vmatprep.mubr.f32.mxu0 0.0
      %1737 = vmatmul.mubr.f32.gmra.mrb[0].mxu0 %v1661
      %v1738 = vpop.f32.mrb[0].mxu0
      %v1739 = vadd.f32 0.0, %v1738
      %v1740 = vpop.f32.mrb[0].mxu0
      %1741 = vmatprep.mubr.f32.mxu0 0.0
      %1742 = vmatmul.mubr.f32.gmra.mrb[0].mxu0 %v1664
      %v1743 = vpop.f32.mrb[0].mxu0
      %v1744 = vadd.f32 0.0, %v1743
      %v1745 = vpop.f32.mrb[0].mxu0
      %1746 = vmatprep.mubr.f32.mxu0 0.0
      %1747 = vmatmul.mubr.f32.gmra.mrb[0].mxu0 %v1667
      %v1748 = vpop.f32.mrb[0].mxu0
      %v1749 = vadd.f32 0.0, %v1748
      %v1750 = vpop.f32.mrb[0].mxu0
      %1751 = vmatprep.mubr.f32.mxu0 0.0
      %1752 = vmatmul.mubr.f32.gmra.mrb[0].mxu0 %v1670
      %v1753 = vpop.f32.mrb[0].mxu0
      %v1754 = vadd.f32 0.0, %v1753
      %v1755 = vpop.f32.mrb[0].mxu0
      %1756 = vdwg.mxu0
      %v1757 = vrcp.pop %v1739
      %v1758 = vmul.f32 %v1641, %v1757
      %v1759 = vrcp.pop %v1744
      %v1760 = vmul.f32 %v1643, %v1759
      %v1761 = vrcp.pop %v1749
      %v1762 = vmul.f32 %v1645, %v1761
      %v1763 = vrcp.pop %v1754
      %v1764 = vmul.f32 %v1647, %v1763
      %1777 = vrot.lane.b32.xlu0 %v1465, 112
      %v1778 = vpop.permute.xlu0 %1777
      %1779 = vrot.lane.b32.xlu0 %v1466, 112
      %v1780 = vpop.permute.xlu0 %1779
      %1781 = vrot.lane.b32.xlu0 %v1467, 112
      %v1782 = vpop.permute.xlu0 %1781
      %1783 = vrot.lane.b32.xlu0 %v1468, 112
      %v1784 = vpop.permute.xlu0 %1783
      %1785 = vrot.lane.b32.xlu0 %v1469, 112
      %v1786 = vpop.permute.xlu0 %1785
      %1787 = vrot.lane.b32.xlu0 %v1470, 112
      %v1788 = vpop.permute.xlu0 %1787
      %1789 = vrot.lane.b32.xlu0 %v1471, 112
      %v1790 = vpop.permute.xlu0 %1789
      %1791 = vrot.lane.b32.xlu0 %v1472, 112
      %v1792 = vpop.permute.xlu0 %1791
      %1793 = vrot.lane.b32.xlu0 %v1473, 112
      %v1794 = vpop.permute.xlu0 %1793
      %1795 = vrot.lane.b32.xlu0 %v1474, 112
      %v1796 = vpop.permute.xlu0 %1795
      %1797 = vrot.lane.b32.xlu0 %v1475, 112
      %v1798 = vpop.permute.xlu0 %1797
      %1799 = vrot.lane.b32.xlu0 %v1476, 112
      %v1800 = vpop.permute.xlu0 %1799
      %v1814 = vsel %vm1623, %v1758, 0
      %v1817 = vsel %vm1623, %v1760, 0
      %v1820 = vsel %vm1623, %v1762, 0
      %v1823 = vsel %vm1623, %v1764, 0
      %1825 = vmatprep.subr.mxu0 0.0
      %1826 = vmatpush1.msra.mxu0 %v1778
      %1827 = vmatprep.subr.mxu0 0.0
      %1828 = vmatpush1.msra.mxu0 %v1780
      %1829 = vmatprep.subr.mxu0 0.0
      %1830 = vmatpush1.msra.mxu0 %v1782
      %1831 = vmatprep.subr.mxu0 0.0
      %1832 = vmatpush1.msra.mxu0 %v1784
      %1833 = vmatprep.subr.mxu0 0.0
      %1834 = vmatpush1.msra.mxu0 %v1786
      %1835 = vmatprep.subr.mxu0 0.0
      %1836 = vmatpush1.msra.mxu0 %v1788
      %1837 = vmatprep.subr.mxu0 0.0
      %1838 = vmatpush1.msra.mxu0 %v1790
      %1839 = vmatprep.subr.mxu0 0.0
      %1840 = vmatpush1.msra.mxu0 %v1792
      %1841 = vmatprep.subr.mxu0 0.0
      %1842 = vmatpush1.msra.mxu0 %v1794
      %1843 = vmatprep.subr.mxu0 0.0
      %1844 = vmatpush1.msra.mxu0 %v1796
      %1845 = vmatprep.subr.mxu0 0.0
      %1846 = vmatpush1.msra.mxu0 %v1798
      %1847 = vmatprep.subr.mxu0 0.0
      %1848 = vmatpush1.msra.mxu0 %v1800
      %1849 = vmatprep.subr.mxu0 0.0
      %1850 = vmatpush1.msra.mxu0 0.0
      %1851 = vmatprep.subr.mxu0 0.0
      %1852 = vmatpush1.msra.mxu0 0.0
      %1853 = vmatprep.subr.mxu0 0.0
      %1854 = vmatpush1.msra.mxu0 0.0
      %1855 = vmatprep.subr.mxu0 0.0
      %1856 = vmatpush1.msra.mxu0 0.0
      %1857 = vmatprep.subr.mxu0 0.0
      %1858 = vmatpush1.msra.mxu0 0.0
      %1859 = vmatprep.subr.mxu0 0.0
      %1860 = vmatpush1.msra.mxu0 0.0
      %1861 = vmatprep.subr.mxu0 0.0
      %1862 = vmatpush1.msra.mxu0 0.0
      %1863 = vmatprep.subr.mxu0 0.0
      %1864 = vmatpush1.msra.mxu0 0.0
      %1865 = vmatprep.subr.mxu0 0.0
      %1866 = vmatpush1.msra.mxu0 0.0
      %1867 = vmatprep.subr.mxu0 0.0
      %1868 = vmatpush1.msra.mxu0 0.0
      %1869 = vmatprep.subr.mxu0 0.0
      %1870 = vmatpush1.msra.mxu0 0.0
      %1871 = vmatprep.subr.mxu0 0.0
      %1872 = vmatpush1.msra.mxu0 0.0
      %1873 = vmatprep.subr.mxu0 0.0
      %1874 = vmatpush1.msra.mxu0 0.0
      %1875 = vmatprep.subr.mxu0 0.0
      %1876 = vmatpush1.msra.mxu0 0.0
      %1877 = vmatprep.subr.mxu0 0.0
      %1878 = vmatpush1.msra.mxu0 0.0
      %1879 = vmatprep.subr.mxu0 0.0
      %1880 = vmatpush1.msra.mxu0 0.0
      %1881 = vmatprep.subr.mxu0 0.0
      %1882 = vmatpush1.msra.mxu0 0.0
      %1883 = vmatprep.subr.mxu0 0.0
      %1884 = vmatpush1.msra.mxu0 0.0
      %1885 = vmatprep.subr.mxu0 0.0
      %1886 = vmatpush1.msra.mxu0 0.0
      %1887 = vmatprep.subr.mxu0 0.0
      %1888 = vmatpush1.msra.mxu0 0.0
      %1889 = vmatprep.mubr.f32.mxu0 0.0
      %1890 = vmatmul.mubr.f32.gmra.mrb[0].mxu0 %v1814
      %v1891 = vpop.f32.mrb[0].mxu0
      %v1892 = vadd.f32 0.0, %v1891
      %v1893 = vpop.f32.mrb[0].mxu0
      %1894 = vmatprep.mubr.f32.mxu0 0.0
      %1895 = vmatmul.mubr.f32.gmra.mrb[0].mxu0 %v1817
      %v1896 = vpop.f32.mrb[0].mxu0
      %v1897 = vadd.f32 0.0, %v1896
      %v1898 = vpop.f32.mrb[0].mxu0
      %1899 = vmatprep.mubr.f32.mxu0 0.0
      %1900 = vmatmul.mubr.f32.gmra.mrb[0].mxu0 %v1820
      %v1901 = vpop.f32.mrb[0].mxu0
      %v1902 = vadd.f32 0.0, %v1901
      %v1903 = vpop.f32.mrb[0].mxu0
      %1904 = vmatprep.mubr.f32.mxu0 0.0
      %1905 = vmatmul.mubr.f32.gmra.mrb[0].mxu0 %v1823
      %v1906 = vpop.f32.mrb[0].mxu0
      %v1907 = vadd.f32 0.0, %v1906
      %v1908 = vpop.f32.mrb[0].mxu0
      %1909 = vdwg.mxu0
      %v1910 = vld [vmem:[%s18] sm:$0xff]
      %v1911 = vld [vmem:[%s18 + $0x8] sm:$0xff]
      %v1912 = vld [vmem:[%s19] sm:$0x1]
      %v1914 = vlaneseq
      %v1915 = vshrl.u32 %v1914, 7
      %v1916 = vsub.s32 0, %v1915
      %v1917 = vrot.slane %v1912, %v1916
      %v1920 = vsel %vm1477, %v1892, 0
      %v1923 = vsel %vm1477, %v1897, 0
      %v1926 = vsel %vm1477, %v1902, 0
      %v1929 = vsel %vm1477, %v1907, 0
      %1931 = vmatprep.subr.mxu0 0.0
      %1932 = vmatpush1.msra.mxu0 %v1910
      %1933 = vmatprep.subr.mxu0 0.0
      %1934 = vmatpush1.msra.mxu0 %v1911
      %1935 = vmatprep.subr.mxu0 0.0
      %1936 = vmatpush1.msra.mxu0 0.0
      %1937 = vmatprep.subr.mxu0 0.0
      %1938 = vmatpush1.msra.mxu0 0.0
      %1939 = vmatprep.subr.mxu0 0.0
      %1940 = vmatpush1.msra.mxu0 0.0
      %1941 = vmatprep.subr.mxu0 0.0
      %1942 = vmatpush1.msra.mxu0 0.0
      %1943 = vmatprep.subr.mxu0 0.0
      %1944 = vmatpush1.msra.mxu0 0.0
      %1945 = vmatprep.subr.mxu0 0.0
      %1946 = vmatpush1.msra.mxu0 0.0
      %1947 = vmatprep.subr.mxu0 0.0
      %1948 = vmatpush1.msra.mxu0 0.0
      %1949 = vmatprep.subr.mxu0 0.0
      %1950 = vmatpush1.msra.mxu0 0.0
      %1951 = vmatprep.subr.mxu0 0.0
      %1952 = vmatpush1.msra.mxu0 0.0
      %1953 = vmatprep.subr.mxu0 0.0
      %1954 = vmatpush1.msra.mxu0 0.0
      %1955 = vmatprep.subr.mxu0 0.0
      %1956 = vmatpush1.msra.mxu0 0.0
      %1957 = vmatprep.subr.mxu0 0.0
      %1958 = vmatpush1.msra.mxu0 0.0
      %1959 = vmatprep.subr.mxu0 0.0
      %1960 = vmatpush1.msra.mxu0 0.0
      %1961 = vmatprep.subr.mxu0 0.0
      %1962 = vmatpush1.msra.mxu0 0.0
      %1963 = vmatprep.subr.mxu0 0.0
      %1964 = vmatpush1.msra.mxu0 0.0
      %1965 = vmatprep.subr.mxu0 0.0
      %1966 = vmatpush1.msra.mxu0 0.0
      %1967 = vmatprep.subr.mxu0 0.0
      %1968 = vmatpush1.msra.mxu0 0.0
      %1969 = vmatprep.subr.mxu0 0.0
      %1970 = vmatpush1.msra.mxu0 0.0
      %1971 = vmatprep.subr.mxu0 0.0
      %1972 = vmatpush1.msra.mxu0 0.0
      %1973 = vmatprep.subr.mxu0 0.0
      %1974 = vmatpush1.msra.mxu0 0.0
      %1975 = vmatprep.subr.mxu0 0.0
      %1976 = vmatpush1.msra.mxu0 0.0
      %1977 = vmatprep.subr.mxu0 0.0
      %1978 = vmatpush1.msra.mxu0 0.0
      %1979 = vmatprep.subr.mxu0 0.0
      %1980 = vmatpush1.msra.mxu0 0.0
      %1981 = vmatprep.subr.mxu0 0.0
      %1982 = vmatpush1.msra.mxu0 0.0
      %1983 = vmatprep.subr.mxu0 0.0
      %1984 = vmatpush1.msra.mxu0 0.0
      %1985 = vmatprep.subr.mxu0 0.0
      %1986 = vmatpush1.msra.mxu0 0.0
      %1987 = vmatprep.subr.mxu0 0.0
      %1988 = vmatpush1.msra.mxu0 0.0
      %1989 = vmatprep.subr.mxu0 0.0
      %1990 = vmatpush1.msra.mxu0 0.0
      %1991 = vmatprep.subr.mxu0 0.0
      %1992 = vmatpush1.msra.mxu0 0.0
      %1993 = vmatprep.subr.mxu0 0.0
      %1994 = vmatpush1.msra.mxu0 0.0
      %1995 = vmatprep.mubr.f32.mxu0 0.0
      %1996 = vmatmul.mubr.f32.gmra.mrb[0].mxu0 %v1920
      %v1997 = vpop.f32.mrb[0].mxu0
      %v1998 = vadd.f32 %v1917, %v1997
      %v1999 = vpop.f32.mrb[0].mxu0
      %2000 = vmatprep.mubr.f32.mxu0 0.0
      %2001 = vmatmul.mubr.f32.gmra.mrb[0].mxu0 %v1923
      %v2002 = vpop.f32.mrb[0].mxu0
      %v2003 = vadd.f32 %v1917, %v2002
      %v2004 = vpop.f32.mrb[0].mxu0
      %2005 = vmatprep.mubr.f32.mxu0 0.0
      %2006 = vmatmul.mubr.f32.gmra.mrb[0].mxu0 %v1926
      %v2007 = vpop.f32.mrb[0].mxu0
      %v2008 = vadd.f32 %v1917, %v2007
      %v2009 = vpop.f32.mrb[0].mxu0
      %2010 = vmatprep.mubr.f32.mxu0 0.0
      %2011 = vmatmul.mubr.f32.gmra.mrb[0].mxu0 %v1929
      %v2012 = vpop.f32.mrb[0].mxu0
      %v2013 = vadd.f32 %v1917, %v2012
      %v2014 = vpop.f32.mrb[0].mxu0
      %2015 = vdwg.mxu0
      %2016 = vst.msk [vmem:[%s646] sm:$0xff] %vm1172, %v1998
      %2017 = vst.msk [vmem:[%s646 + $0x8] sm:$0xff] %vm1172, %v2003
      %2018 = vst.msk [vmem:[%s646 + $0x10] sm:$0xff] %vm1172, %v2008
      %2019 = vst.msk [vmem:[%s646 + $0x18] sm:$0xff] %vm1172, %v2013
      %p2020 = scmp.lt.s32.totalorder %s31, 1
      %s2021 = scalar_select %p2020, %s31, 1
      %s2022 = smul.addr %s2021, 4
      %s2023 = smul.addr %s2022, 8
      %s2024 = scalar_lea.vmem %s20, %s2023
      // Predicated region
      $region101: #{transformer_decoder_forward.1} parent=99 // pred_check
        %p2025 = pneg %p479
      $region102: #{transformer_decoder_forward.1} parent=99 // pred_check_branch
        %2027 = sbr.rel (%p2025) target = $region104
      $region103: #{transformer_decoder_forward.1} parent=99 // pred_region
        _
      $region104: #{transformer_decoder_forward.1} parent=99 // pred_fallthru
        _
    $region100: #{transformer_decoder_forward.1} parent=5 // pred_fallthru
      _
    %p2028 = scmp.le.s32.totalorder 2, %s26
    // Predicated region
    $region105: #{transformer_decoder_forward.1} parent=5 // pred_check
      %p2029 = pneg %p2028
    $region106: #{transformer_decoder_forward.1} parent=5 // pred_check_branch
      %2031 = sbr.rel (%p2029) target = $region108
    $region107: #{transformer_decoder_forward.1} parent=5 // pred_region
      %s2032 = ssub.s32 %s26, 2
      // Predicated region
      $region109: #{transformer_decoder_forward.1} parent=107 // pred_check
        %p2033 = pneg %p485
      $region110: #{transformer_decoder_forward.1} parent=107 // pred_check_branch
        %2035 = sbr.rel (%p2033) target = $region112
      $region111: #{transformer_decoder_forward.1} parent=107 // pred_region
        %p2036 = scmp.lt.s32.totalorder %s32, 1
        %s2037 = scalar_select %p2036, %s32, 1
        %s2038 = smul.addr %s2037, 4
        %s2039 = smul.addr %s2038, 8
        %s2040 = scalar_lea.vmem %s20, %s2039
      $region112: #{transformer_decoder_forward.1} parent=107 // pred_fallthru
        _
    $region108: #{transformer_decoder_forward.1} parent=5 // pred_fallthru
      _
  $region6: #{transformer_decoder_forward.1} parent=0 // loop_footer
    %s30 = sadd.s32 1, %s26
  $region7: #{transformer_decoder_forward.1} parent=0 // loop_footer_branch
    %25 = sbr.rel target = $region3
  $region8: #{transformer_decoder_forward.1} parent=0 // loop_exit
    _

</llo_original>
